<compile_context>
chip_gen: v7x
topology: tpu7x:2x2x1
jax: 0.10.0
libtpu: 0.0.40
codegen_flags: <defaults>
</compile_context>

<pallas_src>
import functools
import math

import jax
import jax.numpy as jnp
from jax.experimental import pallas as pl
from jax.experimental.pallas import tpu as pltpu


def pad_same(size, kernel_size, stride, dilation=1):
    o = math.ceil(size / stride)
    pad = max((o - 1) * stride + (kernel_size - 1) * dilation + 1 - size, 0)
    pad_0 = pad // 2
    pad_1 = pad - pad_0
    return pad, pad_0, pad_1


def _round_up(x, m):
    return (x + m - 1) // m * m


def _choose_h_tile(Ho, Wo_p, max_rows):
    """Largest divisor th of Ho with th*Wo_p <= max_rows (Wo_p is a multiple of 8, so the
    flattened row count is always sublane-aligned).  Falls back to th=1."""
    best = 1
    for th in range(1, Ho + 1):
        if Ho % th == 0 and th * Wo_p <= max_rows:
            best = th
    # TODO(synk): if Wo_p alone exceeds max_rows (very wide images) the tile is oversized;
    # a W-tiled grid axis would be needed.
    return best


def _choose_row_tile(R, max_rows):
    """Largest divisor of R that is a multiple of 8 and <= max_rows."""
    best = 8
    for tr in range(8, min(R, max_rows) + 1, 8):
        if R % tr == 0:
            best = tr
    return best


def _default_vmem_limit():
    try:
        cap = pltpu.get_tpu_info().vmem_capacity_bytes
    except Exception:
        cap = 64 * 1024 * 1024
    return min(int(0.75 * cap), 100 * 1024 * 1024)


# --------------------------------------------------------------------------------------
# Shared per-tile conv: in-VMEM im2col + one deep MXU matmul + masked BN stat partials.
# --------------------------------------------------------------------------------------
def _conv_tile(x_ref, w_ref, h, *, KH, KW, TH, Wo_p, Wo):
    # x_ref: (1, Hp, Wp_p, Cin_p) compute_dtype  -- whole padded image of one batch element
    # w_ref: (KH*KW*Cin_p, Cout_p) compute_dtype -- im2col-flattened weights (resident)
    cin_p = x_ref.shape[3]
    rows = TH * Wo_p

    chunks = []
    for kh in range(KH):                      # static: builds the im2col slab in vregs
        for kw in range(KW):
            xs = x_ref[0, pl.ds(h * TH + kh, TH), pl.ds(kw, Wo_p), :]  # (TH, Wo_p, Cin_p)
            chunks.append(xs.reshape(rows, cin_p))
    cols = jnp.concatenate(chunks, axis=-1)   # (rows, KH*KW*Cin_p)

    acc = jnp.dot(cols, w_ref[...], preferred_element_type=jnp.float32)  # (rows, Cout_p)

    # Padded Wo columns may see real image pixels through the SAME-pad offset, so mask them
    # out of the statistics (the conv values themselves are sliced away by the wrapper).
    if Wo_p != Wo:
        wo_idx = jax.lax.broadcasted_iota(jnp.int32, (rows, 1), 0) % Wo_p
        acc_m = acc * (wo_idx < Wo).astype(jnp.float32)
    else:
        acc_m = acc

    part = jnp.concatenate(
        [jnp.sum(acc_m, axis=0, keepdims=True),
         jnp.sum(acc_m * acc_m, axis=0, keepdims=True)],
        axis=0)                                # (2, Cout_p)
    return acc, part


# --------------------------------------------------------------------------------------
# Fused single-pass kernel: conv tiles -> resident VMEM slab, global stats, BN+Swish
# epilogue at the last grid step.  Output stays in VMEM until one final HBM writeback.
# --------------------------------------------------------------------------------------
def _fused_kernel(x_ref, w_ref, gb_ref, out_ref, conv_ref, stats_ref, *,
                  KH, KW, TH, Wo_p, Wo, Cout, eps, inv_count, n_tiles):
    n = pl.program_id(0)
    h = pl.program_id(1)
    n_h = pl.num_programs(1)
    rows = TH * Wo_p

    acc, part = _conv_tile(x_ref, w_ref, h, KH=KH, KW=KW, TH=TH, Wo_p=Wo_p, Wo=Wo)

    @pl.when(jnp.logical_and(n == 0, h == 0))
    def _():
        stats_ref[...] = jnp.zeros_like(stats_ref)

    stats_ref[...] += part

    tile = n * n_h + h
    row0 = pl.multiple_of(tile * rows, 8)
    conv_ref[pl.ds(row0, rows), :] = acc       # stage conv tile in the resident VMEM slab

    last = jnp.logical_and(n == pl.num_programs(0) - 1, h == n_h - 1)

    @pl.when(last)
    def _():
        st = stats_ref[...]
        gb = gb_ref[...]
        mean = st[0:1, :] * inv_count
        var = jnp.maximum(st[1:2, :] * inv_count - mean * mean, 0.0)
        scale = gb[0:1, :] * jax.lax.rsqrt(var + eps)
        shift = gb[1:2, :] - mean * scale

        @pl.loop(0, n_tiles)
        def _(t):
            r0 = pl.multiple_of(t * rows, 8)
            y = conv_ref[pl.ds(r0, rows), :] * scale + shift
            y = y * jax.nn.sigmoid(y)
            out_ref[pl.ds(r0, rows), :] = y[:, :Cout].astype(out_ref.dtype)


# --------------------------------------------------------------------------------------
# Two-pass fallback (large conv slabs).
# Pass 1: conv tile + per-batch BN stat partials (batch axis stays "parallel").
# --------------------------------------------------------------------------------------
def _conv_stats_kernel(x_ref, w_ref, conv_out_ref, stats_ref, *, KH, KW, TH, Wo_p, Wo):
    h = pl.program_id(1)
    acc, part = _conv_tile(x_ref, w_ref, h, KH=KH, KW=KW, TH=TH, Wo_p=Wo_p, Wo=Wo)
    conv_out_ref[...] = acc

    @pl.when(h == 0)
    def _():
        stats_ref[...] = jnp.zeros_like(stats_ref)

    stats_ref[...] += part[None]


# Pass 2: folded BN affine + Swish, lane-dense reads, narrow (full-extent Cout) writes.
def _bn_swish_kernel(conv_ref, scale_ref, shift_ref, o_ref):
    y = conv_ref[...] * scale_ref[...] + shift_ref[...]
    y = y * jax.nn.sigmoid(y)
    o_ref[...] = y[:, :o_ref.shape[1]].astype(o_ref.dtype)


def conv2d_same_padding_bn_swish(x_nchw, weight_oihw, bias, gamma, beta, *,
                                 stride=1, eps=1e-3,
                                 compute_dtype=jnp.bfloat16,
                                 max_tile_rows=256,
                                 vmem_limit_bytes=None,
                                 fuse=None):
    """Forward of Conv2dSamePaddingBNSwish (group=1, dilation=1, training-mode BN)."""
    del bias  # Exactly cancelled by training-mode BN mean subtraction (see TODO above).
    assert stride == 1, "TODO(synk): strided conv (stride > 1) not implemented"
    N, Cin, H, W = x_nchw.shape
    Cout, Cin_w, KH, KW = weight_oihw.shape
    assert Cin == Cin_w, "TODO(synk): grouped conv (group > 1) not implemented"

    if vmem_limit_bytes is None:
        vmem_limit_bytes = _default_vmem_limit()

    _, h0, h1 = pad_same(H, KH, stride)
    _, w0, w1 = pad_same(W, KW, stride)
    Ho, Wo = H, W                                     # SAME padding, stride 1
    Wo_p = _round_up(Wo, 8)                           # sublane-aligned row blocks
    cin_mult = 16 if jnp.dtype(compute_dtype).itemsize == 2 else 8
    Cin_p = _round_up(Cin, cin_mult)
    Cout_p = _round_up(Cout, 128)                     # lane-dense MXU output channels

    # ---- wrapper glue: NCHW -> NHWC, SAME zero-pad (+W alignment pad), channel pad ------
    Hp = H + h0 + h1
    Wp_p = Wo_p + (KW - 1)
    extra_w = Wp_p - (W + w0 + w1)
    x = jnp.transpose(x_nchw, (0, 2, 3, 1))
    x = jnp.pad(x, ((0, 0), (h0, h1), (w0, w1 + extra_w), (0, Cin_p - Cin)))
    x = x.astype(compute_dtype)

    # Weights (O, I, KH, KW) -> im2col-flattened (KH*KW*Cin_p, Cout_p).
    w = jnp.transpose(weight_oihw, (2, 3, 1, 0))      # (KH, KW, Cin, Cout)
    w = jnp.pad(w, ((0, 0), (0, 0), (0, Cin_p - Cin), (0, Cout_p - Cout)))
    K_total = KH * KW * Cin_p
    w = w.reshape(K_total, Cout_p).astype(compute_dtype)

    TH = _choose_h_tile(Ho, Wo_p, max_tile_rows)
    n_h = Ho // TH
    rows = TH * Wo_p
    R_pad = N * Ho * Wo_p
    R_real = N * Ho * Wo

    gamma_p = jnp.pad(gamma.astype(jnp.float32), (0, Cout_p - Cout))
    beta_p = jnp.pad(beta.astype(jnp.float32), (0, Cout_p - Cout))

    bpe = jnp.dtype(compute_dtype).itemsize
    x_block_bytes = Hp * Wp_p * Cin_p * bpe
    w_bytes = K_total * Cout_p * bpe
    conv_slab_bytes = R_pad * Cout_p * 4
    out_slab_bytes = R_pad * Cout * 4
    fused_vmem = (2 * x_block_bytes + 2 * w_bytes + conv_slab_bytes
                  + 2 * out_slab_bytes + 4 * 2 * Cout_p * 4)
    if fuse is None:
        fuse = fused_vmem <= int(0.6 * vmem_limit_bytes)

    flops = 2 * R_pad * K_total * Cout_p

    if fuse:
        # ---- fused single-pass: conv + stats + in-kernel BN/Swish epilogue --------------
        # (Resident scratch across the grid forces "arbitrary" semantics; the two-pass
        #  fallback below keeps a megacore-friendly "parallel" batch axis instead.)
        gb = jnp.stack([gamma_p, beta_p], axis=0)     # (2, Cout_p)
        cost = pl.CostEstimate(
            flops=flops, transcendentals=R_pad * Cout_p,
            bytes_accessed=N * x_block_bytes + w_bytes + out_slab_bytes)
        out_flat = pl.pallas_call(
            functools.partial(_fused_kernel, KH=KH, KW=KW, TH=TH, Wo_p=Wo_p, Wo=Wo,
                              Cout=Cout, eps=eps, inv_count=1.0 / R_real,
                              n_tiles=N * n_h),
            grid=(N, n_h),
            in_specs=[
                pl.BlockSpec((1, Hp, Wp_p, Cin_p), lambda n, h: (n, 0, 0, 0)),
                pl.BlockSpec((K_total, Cout_p), lambda n, h: (0, 0)),
                pl.BlockSpec((2, Cout_p), lambda n, h: (0, 0)),
            ],
            out_specs=pl.BlockSpec((R_pad, Cout), lambda n, h: (0, 0)),
            out_shape=jax.ShapeDtypeStruct((R_pad, Cout), jnp.float32),
            scratch_shapes=[pltpu.VMEM((R_pad, Cout_p), jnp.float32),
                            pltpu.VMEM((2, Cout_p), jnp.float32)],
            compiler_params=pltpu.CompilerParams(
                dimension_semantics=("arbitrary", "arbitrary"),
                vmem_limit_bytes=vmem_limit_bytes),
            cost_estimate=cost,
        )(x, w, gb)
    else:
        # ---- pass 1: tiled conv + per-batch stat partials (batch axis "parallel") -------
        cost1 = pl.CostEstimate(
            flops=flops, transcendentals=0,
            bytes_accessed=N * x_block_bytes + w_bytes + conv_slab_bytes)
        conv_flat, stats = pl.pallas_call(
            functools.partial(_conv_stats_kernel, KH=KH, KW=KW, TH=TH, Wo_p=Wo_p, Wo=Wo),
            grid=(N, n_h),
            in_specs=[
                pl.BlockSpec((1, Hp, Wp_p, Cin_p), lambda n, h: (n, 0, 0, 0)),
                pl.BlockSpec((K_total, Cout_p), lambda n, h: (0, 0)),
            ],
            out_specs=[
                pl.BlockSpec((rows, Cout_p), lambda n, h, n_h=n_h: (n * n_h + h, 0)),
                pl.BlockSpec((1, 2, Cout_p), lambda n, h: (n, 0, 0)),
            ],
            out_shape=[
                jax.ShapeDtypeStruct((R_pad, Cout_p), jnp.float32),
                jax.ShapeDtypeStruct((N, 2, Cout_p), jnp.float32),
            ],
            compiler_params=pltpu.CompilerParams(
                dimension_semantics=("parallel", "arbitrary"),
                vmem_limit_bytes=vmem_limit_bytes),
            cost_estimate=cost1,
        )(x, w)

        stats = jnp.sum(stats, axis=0)                # (2, Cout_p)
        mean = stats[0] / R_real
        var = jnp.maximum(stats[1] / R_real - mean * mean, 0.0)
        scale = (gamma_p * jax.lax.rsqrt(var + eps)).reshape(1, Cout_p)
        shift = (beta_p - mean * gamma_p * jax.lax.rsqrt(var + eps)).reshape(1, Cout_p)

        # ---- pass 2: large lane-dense tiles, narrow (full-extent Cout) output -----------
        TR = _choose_row_tile(R_pad, max_rows=4096)
        cost2 = pl.CostEstimate(
            flops=3 * R_pad * Cout_p, transcendentals=R_pad * Cout_p,
            bytes_accessed=conv_slab_bytes + out_slab_bytes)
        out_flat = pl.pallas_call(
            _bn_swish_kernel,
            grid=(R_pad // TR,),
            in_specs=[
                pl.BlockSpec((TR, Cout_p), lambda i: (i, 0)),
                pl.BlockSpec((1, Cout_p), lambda i: (0, 0)),
                pl.BlockSpec((1, Cout_p), lambda i: (0, 0)),
            ],
            out_specs=pl.BlockSpec((TR, Cout), lambda i: (i, 0)),
            out_shape=jax.ShapeDtypeStruct((R_pad, Cout), jnp.float32),
            compiler_params=pltpu.CompilerParams(
                dimension_semantics=("parallel",),
                vmem_limit_bytes=vmem_limit_bytes),
            cost_estimate=cost2,
        )(conv_flat, scale, shift)

    # ---- wrapper glue: drop W alignment pad, back to PyTorch's NCHW ----------------------
    out = out_flat.reshape(N, Ho, Wo_p, Cout)[:, :, :Wo, :].transpose(0, 3, 1, 2)
    return out


def _reference(x_nchw, weight_oihw, bias, gamma, beta, *, stride=1, eps=1e-3):
    N, Cin, H, W = x_nchw.shape
    Cout, _, KH, KW = weight_oihw.shape
    _, h0, h1 = pad_same(H, KH, stride)
    _, w0, w1 = pad_same(W, KW, stride)
    xp = jnp.pad(x_nchw, ((0, 0), (0, 0), (h0, h1), (w0, w1)))
    conv = jax.lax.conv_general_dilated(
        xp, weight_oihw, (stride, stride), "VALID",
        dimension_numbers=("NCHW", "OIHW", "NCHW"))
    conv = conv + bias[None, :, None, None]
    mean = conv.mean(axis=(0, 2, 3), keepdims=True)
    var = ((conv - mean) ** 2).mean(axis=(0, 2, 3), keepdims=True)
    y = (conv - mean) * jax.lax.rsqrt(var + eps) * gamma[None, :, None, None] \
        + beta[None, :, None, None]
    return y * jax.nn.sigmoid(y)


def _run_and_check(x, weight, bias, gamma, beta, *, max_tile_rows):
    # Reference on bf16-rounded inputs (the kernel feeds the MXU bf16, accumulates in f32,
    # and relies on the exact bias-cancellation of training-mode BN).
    ref = _reference(x.astype(jnp.bfloat16).astype(jnp.float32),
                     weight.astype(jnp.bfloat16).astype(jnp.float32),
                     bias, gamma, beta, stride=1, eps=1e-3)
    for fuse in (True, False):                 # exercise both the fused and two-pass paths
        out = conv2d_same_padding_bn_swish(x, weight, bias, gamma, beta,
                                           stride=1, eps=1e-3,
                                           max_tile_rows=max_tile_rows, fuse=fuse)
        out = jax.block_until_ready(out)
        assert out.shape == ref.shape, (out.shape, ref.shape)
        max_err = float(jnp.max(jnp.abs(out - ref)))
        assert jnp.allclose(out, ref, rtol=2e-4, atol=2e-4), (fuse, max_err)


if __name__ == "__main__":
    key = jax.random.PRNGKey(0)
    # Case 1: 16x16 image -> exercises multi-H-tile stats accumulation (TH=8, grid (2,2)).
    # Case 2: 12x12 image -> W not a multiple of 8: exercises Wo padding + the stats mask.
    for (N, Cin, H, W, Cout, K) in [(2, 4, 16, 16, 8, 3), (2, 4, 12, 12, 8, 3)]:
        key, kx, kw, kb, kg, kbe = jax.random.split(key, 6)
        x = jax.random.normal(kx, (N, Cin, H, W), dtype=jnp.float32)
        weight = 0.1 * jax.random.normal(kw, (Cout, Cin, K, K), dtype=jnp.float32)
        bias = 0.1 * jax.random.normal(kb, (Cout,), dtype=jnp.float32)
        gamma = 1.0 + 0.1 * jax.random.normal(kg, (Cout,), dtype=jnp.float32)
        beta = 0.1 * jax.random.normal(kbe, (Cout,), dtype=jnp.float32)
        _run_and_check(x, weight, bias, gamma, beta, max_tile_rows=128)
    print("KERNEL_OK")
</pallas_src>

<mosaic_0001>
module attributes {stable_mosaic.version = 11 : i64} {
  func.func @_fused_kernel(%arg0: i32, %arg1: i32, %arg2: memref<1x18x18x16xbf16, #tpu.memory_space<vmem>>, %arg3: memref<144x128xbf16, #tpu.memory_space<vmem>>, %arg4: memref<2x128xf32, #tpu.memory_space<vmem>>, %arg5: memref<512x8xf32, #tpu.memory_space<vmem>>, %arg6: memref<512x128xf32, #tpu.memory_space<vmem>>, %arg7: memref<2x128xf32, #tpu.memory_space<vmem>>) attributes {dimension_semantics = [#tpu.dimension_semantics<arbitrary>, #tpu.dimension_semantics<arbitrary>], iteration_bounds = array<i64: 2, 2>, scalar_prefetch = 0 : i64, scratch_operands = 2 : i64, tpu.core_type = #tpu.core_type<tc>, window_params = [{transform_indices = @transform_0, window_bounds = array<i64: 1, 18, 18, 16>}, {pipeline_mode = #tpu.pipeline_mode<synchronous>, transform_indices = @transform_1, window_bounds = array<i64: 144, 128>}, {pipeline_mode = #tpu.pipeline_mode<synchronous>, transform_indices = @transform_2, window_bounds = array<i64: 2, 128>}, {pipeline_mode = #tpu.pipeline_mode<synchronous>, transform_indices = @transform_3, window_bounds = array<i64: 512, 8>}]} {
    %c8_i32 = arith.constant 8 : i32
    %0 = arith.muli %arg1, %c8_i32 : i32
    %c0_i32 = arith.constant 0 : i32
    %1 = arith.addi %0, %c0_i32 : i32
    %c0 = arith.constant 0 : index
    %2 = arith.index_cast %1 : i32 to index
    %c0_0 = arith.constant 0 : index
    %c0_1 = arith.constant 0 : index
    %3 = vector.load %arg2[%c0, %2, %c0_0, %c0_1] : memref<1x18x18x16xbf16, #tpu.memory_space<vmem>>, vector<1x8x16x16xbf16>
    %4 = vector.shape_cast %3 : vector<1x8x16x16xbf16> to vector<8x16x16xbf16>
    %5 = vector.shape_cast %4 : vector<8x16x16xbf16> to vector<128x16xbf16>
    %c8_i32_2 = arith.constant 8 : i32
    %6 = arith.muli %arg1, %c8_i32_2 : i32
    %c0_i32_3 = arith.constant 0 : i32
    %7 = arith.addi %6, %c0_i32_3 : i32
    %c0_4 = arith.constant 0 : index
    %8 = arith.index_cast %7 : i32 to index
    %c1 = arith.constant 1 : index
    %c0_5 = arith.constant 0 : index
    %9 = vector.load %arg2[%c0_4, %8, %c1, %c0_5] : memref<1x18x18x16xbf16, #tpu.memory_space<vmem>>, vector<1x8x16x16xbf16>
    %10 = vector.shape_cast %9 : vector<1x8x16x16xbf16> to vector<8x16x16xbf16>
    %11 = vector.shape_cast %10 : vector<8x16x16xbf16> to vector<128x16xbf16>
    %c8_i32_6 = arith.constant 8 : i32
    %12 = arith.muli %arg1, %c8_i32_6 : i32
    %c0_i32_7 = arith.constant 0 : i32
    %13 = arith.addi %12, %c0_i32_7 : i32
    %c0_8 = arith.constant 0 : index
    %14 = arith.index_cast %13 : i32 to index
    %c2 = arith.constant 2 : index
    %c0_9 = arith.constant 0 : index
    %15 = vector.load %arg2[%c0_8, %14, %c2, %c0_9] : memref<1x18x18x16xbf16, #tpu.memory_space<vmem>>, vector<1x8x16x16xbf16>
    %16 = vector.shape_cast %15 : vector<1x8x16x16xbf16> to vector<8x16x16xbf16>
    %17 = vector.shape_cast %16 : vector<8x16x16xbf16> to vector<128x16xbf16>
    %c8_i32_10 = arith.constant 8 : i32
    %18 = arith.muli %arg1, %c8_i32_10 : i32
    %c1_i32 = arith.constant 1 : i32
    %19 = arith.addi %18, %c1_i32 : i32
    %c0_11 = arith.constant 0 : index
    %20 = arith.index_cast %19 : i32 to index
    %c0_12 = arith.constant 0 : index
    %c0_13 = arith.constant 0 : index
    %21 = vector.load %arg2[%c0_11, %20, %c0_12, %c0_13] : memref<1x18x18x16xbf16, #tpu.memory_space<vmem>>, vector<1x8x16x16xbf16>
    %22 = vector.shape_cast %21 : vector<1x8x16x16xbf16> to vector<8x16x16xbf16>
    %23 = vector.shape_cast %22 : vector<8x16x16xbf16> to vector<128x16xbf16>
    %c8_i32_14 = arith.constant 8 : i32
    %24 = arith.muli %arg1, %c8_i32_14 : i32
    %c1_i32_15 = arith.constant 1 : i32
    %25 = arith.addi %24, %c1_i32_15 : i32
    %c0_16 = arith.constant 0 : index
    %26 = arith.index_cast %25 : i32 to index
    %c1_17 = arith.constant 1 : index
    %c0_18 = arith.constant 0 : index
    %27 = vector.load %arg2[%c0_16, %26, %c1_17, %c0_18] : memref<1x18x18x16xbf16, #tpu.memory_space<vmem>>, vector<1x8x16x16xbf16>
    %28 = vector.shape_cast %27 : vector<1x8x16x16xbf16> to vector<8x16x16xbf16>
    %29 = vector.shape_cast %28 : vector<8x16x16xbf16> to vector<128x16xbf16>
    %c8_i32_19 = arith.constant 8 : i32
    %30 = arith.muli %arg1, %c8_i32_19 : i32
    %c1_i32_20 = arith.constant 1 : i32
    %31 = arith.addi %30, %c1_i32_20 : i32
    %c0_21 = arith.constant 0 : index
    %32 = arith.index_cast %31 : i32 to index
    %c2_22 = arith.constant 2 : index
    %c0_23 = arith.constant 0 : index
    %33 = vector.load %arg2[%c0_21, %32, %c2_22, %c0_23] : memref<1x18x18x16xbf16, #tpu.memory_space<vmem>>, vector<1x8x16x16xbf16>
    %34 = vector.shape_cast %33 : vector<1x8x16x16xbf16> to vector<8x16x16xbf16>
    %35 = vector.shape_cast %34 : vector<8x16x16xbf16> to vector<128x16xbf16>
    %c8_i32_24 = arith.constant 8 : i32
    %36 = arith.muli %arg1, %c8_i32_24 : i32
    %c2_i32 = arith.constant 2 : i32
    %37 = arith.addi %36, %c2_i32 : i32
    %c0_25 = arith.constant 0 : index
    %38 = arith.index_cast %37 : i32 to index
    %c0_26 = arith.constant 0 : index
    %c0_27 = arith.constant 0 : index
    %39 = vector.load %arg2[%c0_25, %38, %c0_26, %c0_27] : memref<1x18x18x16xbf16, #tpu.memory_space<vmem>>, vector<1x8x16x16xbf16>
    %40 = vector.shape_cast %39 : vector<1x8x16x16xbf16> to vector<8x16x16xbf16>
    %41 = vector.shape_cast %40 : vector<8x16x16xbf16> to vector<128x16xbf16>
    %c8_i32_28 = arith.constant 8 : i32
    %42 = arith.muli %arg1, %c8_i32_28 : i32
    %c2_i32_29 = arith.constant 2 : i32
    %43 = arith.addi %42, %c2_i32_29 : i32
    %c0_30 = arith.constant 0 : index
    %44 = arith.index_cast %43 : i32 to index
    %c1_31 = arith.constant 1 : index
    %c0_32 = arith.constant 0 : index
    %45 = vector.load %arg2[%c0_30, %44, %c1_31, %c0_32] : memref<1x18x18x16xbf16, #tpu.memory_space<vmem>>, vector<1x8x16x16xbf16>
    %46 = vector.shape_cast %45 : vector<1x8x16x16xbf16> to vector<8x16x16xbf16>
    %47 = vector.shape_cast %46 : vector<8x16x16xbf16> to vector<128x16xbf16>
    %c8_i32_33 = arith.constant 8 : i32
    %48 = arith.muli %arg1, %c8_i32_33 : i32
    %c2_i32_34 = arith.constant 2 : i32
    %49 = arith.addi %48, %c2_i32_34 : i32
    %c0_35 = arith.constant 0 : index
    %50 = arith.index_cast %49 : i32 to index
    %c2_36 = arith.constant 2 : index
    %c0_37 = arith.constant 0 : index
    %51 = vector.load %arg2[%c0_35, %50, %c2_36, %c0_37] : memref<1x18x18x16xbf16, #tpu.memory_space<vmem>>, vector<1x8x16x16xbf16>
    %52 = vector.shape_cast %51 : vector<1x8x16x16xbf16> to vector<8x16x16xbf16>
    %53 = vector.shape_cast %52 : vector<8x16x16xbf16> to vector<128x16xbf16>
    %54 = tpu.concatenate %5, %11, %17, %23, %29, %35, %41, %47, %53 in 1 : vector<128x16xbf16>, vector<128x16xbf16>, vector<128x16xbf16>, vector<128x16xbf16>, vector<128x16xbf16>, vector<128x16xbf16>, vector<128x16xbf16>, vector<128x16xbf16>, vector<128x16xbf16> -> vector<128x144xbf16>
    %c0_38 = arith.constant 0 : index
    %c0_39 = arith.constant 0 : index
    %55 = vector.load %arg3[%c0_38, %c0_39] : memref<144x128xbf16, #tpu.memory_space<vmem>>, vector<144x128xbf16>
    %cst = arith.constant dense<0.000000e+00> : vector<128x128xf32>
    %56 = tpu.matmul %54, %55, %cst {dimension_numbers = #tpu.dot_dimension_numbers<[1], [0], [0], [1], [0, 0, 1, 1], [], []>} : vector<128x144xbf16>, vector<144x128xbf16>, vector<128x128xf32> -> vector<128x128xf32>
    %cst_40 = arith.constant dense<0.000000e+00> : vector<128xf32>
    %57 = vector.multi_reduction <add>, %56, %cst_40 [0] : vector<128x128xf32> to vector<128xf32>
    %58 = vector.shape_cast %57 : vector<128xf32> to vector<1x128xf32>
    %59 = arith.mulf %56, %56 : vector<128x128xf32>
    %cst_41 = arith.constant dense<0.000000e+00> : vector<128xf32>
    %60 = vector.multi_reduction <add>, %59, %cst_41 [0] : vector<128x128xf32> to vector<128xf32>
    %61 = vector.shape_cast %60 : vector<128xf32> to vector<1x128xf32>
    %62 = tpu.concatenate %58, %61 in 0 : vector<1x128xf32>, vector<1x128xf32> -> vector<2x128xf32>
    %c0_i32_42 = arith.constant 0 : i32
    %63 = arith.cmpi eq, %arg0, %c0_i32_42 : i32
    %c0_i32_43 = arith.constant 0 : i32
    %64 = arith.cmpi eq, %arg1, %c0_i32_43 : i32
    %65 = arith.andi %63, %64 : i1
    %66 = arith.extui %65 : i1 to i32
    %c0_i32_44 = arith.constant 0 : i32
    %67 = arith.cmpi ne, %66, %c0_i32_44 : i32
    scf.if %67 {
      %cst_54 = arith.constant 0.000000e+00 : f32
      %82 = vector.broadcast %cst_54 : f32 to vector<2x128xf32>
      %c0_55 = arith.constant 0 : index
      %c0_56 = arith.constant 0 : index
      %83 = vector.load %arg7[%c0_55, %c0_56] : memref<2x128xf32, #tpu.memory_space<vmem>>, vector<2x128xf32>
      tpu.vector_store %arg7[%c0_55, %c0_56], %82 {strides = array<i32>} : memref<2x128xf32, #tpu.memory_space<vmem>>, vector<2x128xf32>,
    } else {
    }
    %c0_45 = arith.constant 0 : index
    %c0_46 = arith.constant 0 : index
    %68 = vector.load %arg7[%c0_45, %c0_46] : memref<2x128xf32, #tpu.memory_space<vmem>>, vector<2x128xf32>
    %69 = arith.addf %68, %62 : vector<2x128xf32>
    %c0_47 = arith.constant 0 : index
    %c0_48 = arith.constant 0 : index
    %70 = vector.load %arg7[%c0_47, %c0_48] : memref<2x128xf32, #tpu.memory_space<vmem>>, vector<2x128xf32>
    tpu.vector_store %arg7[%c0_47, %c0_48], %69 {strides = array<i32>} : memref<2x128xf32, #tpu.memory_space<vmem>>, vector<2x128xf32>,
    %c2_i32_49 = arith.constant 2 : i32
    %71 = arith.muli %arg0, %c2_i32_49 : i32
    %72 = arith.addi %71, %arg1 : i32
    %c128_i32 = arith.constant 128 : i32
    %73 = arith.muli %72, %c128_i32 : i32
    %74 = tpu.assume_multiple %73, 8 : i32
    %75 = arith.index_cast %74 : i32 to index
    %c0_50 = arith.constant 0 : index
    %76 = vector.load %arg6[%75, %c0_50] : memref<512x128xf32, #tpu.memory_space<vmem>>, vector<128x128xf32>
    tpu.vector_store %arg6[%75, %c0_50], %56 {strides = array<i32>} : memref<512x128xf32, #tpu.memory_space<vmem>>, vector<128x128xf32>,
    %c1_i32_51 = arith.constant 1 : i32
    %77 = arith.cmpi eq, %arg0, %c1_i32_51 : i32
    %c1_i32_52 = arith.constant 1 : i32
    %78 = arith.cmpi eq, %arg1, %c1_i32_52 : i32
    %79 = arith.andi %77, %78 : i1
    %80 = arith.extui %79 : i1 to i32
    %c0_i32_53 = arith.constant 0 : i32
    %81 = arith.cmpi ne, %80, %c0_i32_53 : i32
    scf.if %81 {
      %c0_54 = arith.constant 0 : index
      %c0_55 = arith.constant 0 : index
      %82 = vector.load %arg7[%c0_54, %c0_55] : memref<2x128xf32, #tpu.memory_space<vmem>>, vector<2x128xf32>
      %c0_56 = arith.constant 0 : index
      %c0_57 = arith.constant 0 : index
      %83 = vector.load %arg4[%c0_56, %c0_57] : memref<2x128xf32, #tpu.memory_space<vmem>>, vector<2x128xf32>
      %84 = vector.extract_strided_slice %82 {offsets = [0, 0], sizes = [1, 128], strides = [1, 1]} : vector<2x128xf32> to vector<1x128xf32>
      %cst_58 = arith.constant 0.001953125 : f32
      %85 = vector.broadcast %cst_58 : f32 to vector<1x128xf32>
      %86 = arith.mulf %84, %85 : vector<1x128xf32>
      %87 = vector.extract_strided_slice %82 {offsets = [1, 0], sizes = [1, 128], strides = [1, 1]} : vector<2x128xf32> to vector<1x128xf32>
      %cst_59 = arith.constant 0.001953125 : f32
      %88 = vector.broadcast %cst_59 : f32 to vector<1x128xf32>
      %89 = arith.mulf %87, %88 : vector<1x128xf32>
      %90 = arith.mulf %86, %86 : vector<1x128xf32>
      %91 = arith.subf %89, %90 : vector<1x128xf32>
      %cst_60 = arith.constant 0.000000e+00 : f32
      %92 = vector.broadcast %cst_60 : f32 to vector<1x128xf32>
      %93 = arith.maximumf %91, %92 : vector<1x128xf32>
      %94 = vector.extract_strided_slice %83 {offsets = [0, 0], sizes = [1, 128], strides = [1, 1]} : vector<2x128xf32> to vector<1x128xf32>
      %cst_61 = arith.constant 1.000000e-03 : f32
      %95 = vector.broadcast %cst_61 : f32 to vector<1x128xf32>
      %96 = arith.addf %93, %95 : vector<1x128xf32>
      %97 = math.rsqrt %96 : vector<1x128xf32>
      %98 = arith.mulf %94, %97 : vector<1x128xf32>
      %99 = vector.extract_strided_slice %83 {offsets = [1, 0], sizes = [1, 128], strides = [1, 1]} : vector<2x128xf32> to vector<1x128xf32>
      %100 = arith.mulf %86, %98 : vector<1x128xf32>
      %101 = arith.subf %99, %100 : vector<1x128xf32>
      %c0_i32_62 = arith.constant 0 : i32
      %c4_i32 = arith.constant 4 : i32
      %102 = arith.addi %c0_i32_62, %c4_i32 : i32
      %c1_i32_63 = arith.constant 1 : i32
      scf.for %arg8 = %c0_i32_62 to %102 step %c1_i32_63  : i32 {
        %c1_i32_65 = arith.constant 1 : i32
        %103 = arith.muli %arg8, %c1_i32_65 : i32
        %c0_i32_66 = arith.constant 0 : i32
        %104 = arith.addi %c0_i32_66, %103 : i32
        %c128_i32_67 = arith.constant 128 : i32
        %105 = arith.muli %104, %c128_i32_67 : i32
        %106 = tpu.assume_multiple %105, 8 : i32
        %107 = arith.index_cast %106 : i32 to index
        %c0_68 = arith.constant 0 : index
        %108 = vector.load %arg6[%107, %c0_68] : memref<512x128xf32, #tpu.memory_space<vmem>>, vector<128x128xf32>
        %109 = vector.broadcast %98 : vector<1x128xf32> to vector<128x128xf32>
        %110 = arith.mulf %108, %109 : vector<128x128xf32>
        %111 = vector.broadcast %101 : vector<1x128xf32> to vector<128x128xf32>
        %112 = arith.addf %110, %111 : vector<128x128xf32>
        %113 = arith.negf %112 : vector<128x128xf32>
        %114 = math.exp %113 : vector<128x128xf32>
        %cst_69 = arith.constant 1.000000e+00 : f32
        %115 = vector.broadcast %cst_69 : f32 to vector<128x128xf32>
        %116 = arith.addf %115, %114 : vector<128x128xf32>
        %117 = arith.divf %115, %116 : vector<128x128xf32>
        %118 = arith.mulf %112, %117 : vector<128x128xf32>
        %119 = vector.extract_strided_slice %118 {offsets = [0, 0], sizes = [128, 8], strides = [1, 1]} : vector<128x128xf32> to vector<128x8xf32>
        %120 = arith.index_cast %106 : i32 to index
        %c0_70 = arith.constant 0 : index
        %121 = vector.load %arg5[%120, %c0_70] : memref<512x8xf32, #tpu.memory_space<vmem>>, vector<128x8xf32>
        tpu.vector_store %arg5[%120, %c0_70], %119 {strides = array<i32>} : memref<512x8xf32, #tpu.memory_space<vmem>>, vector<128x8xf32>,
      }
      %c4_i32_64 = arith.constant 4 : i32
    } else {
    }
    return
  }
  func.func @transform_0(%arg0: i32, %arg1: i32) -> (i32, i32, i32, i32) {
    %c0_i32 = arith.constant 0 : i32
    %c0_i32_0 = arith.constant 0 : i32
    %c0_i32_1 = arith.constant 0 : i32
    %c0_i32_2 = arith.constant 0 : i32
    return %arg0, %c0_i32, %c0_i32_0, %c0_i32_1 : i32, i32, i32, i32
  }
  func.func @transform_1(%arg0: i32, %arg1: i32) -> (i32, i32) {
    %c0_i32 = arith.constant 0 : i32
    %c0_i32_0 = arith.constant 0 : i32
    %c0_i32_1 = arith.constant 0 : i32
    return %c0_i32, %c0_i32_0 : i32, i32
  }
  func.func @transform_2(%arg0: i32, %arg1: i32) -> (i32, i32) {
    %c0_i32 = arith.constant 0 : i32
    %c0_i32_0 = arith.constant 0 : i32
    %c0_i32_1 = arith.constant 0 : i32
    return %c0_i32, %c0_i32_0 : i32, i32
  }
  func.func @transform_3(%arg0: i32, %arg1: i32) -> (i32, i32) {
    %c0_i32 = arith.constant 0 : i32
    %c0_i32_0 = arith.constant 0 : i32
    %c0_i32_1 = arith.constant 0 : i32
    return %c0_i32, %c0_i32_0 : i32, i32
  }
}

</mosaic_0001>

<llo_original>
// kernel: tpu_custom_call.1
$region0: #{tpu_custom_call.1}
  #allocation0 [shape = 'u32[]', space=smem, size = 0x4, offset = 0x4, fixed_abs, tag = 'smem constant byte address 0x4 - core index']
  #allocation1 [shape = 'u32[144,128]{1,0:T(1,128)}', space=vmem, size = 0x12000, scoped, tag = 'internal scratch']
  #allocation2 [shape = 'f32[512,128]{1,0:T(8,128)}', space=vmem, size = 0x40000, scoped, tag = 'scratch operand']
  #allocation3 [shape = 'f32[2,128]{1,0:T(2,128)}', space=vmem, size = 0x400, scoped, tag = 'scratch operand']
  %s0 = inlined_call_operand.vmem [shape: bf16[2,18,18,16], index: 0, kind: input, shape index: {}]
  %s1 = inlined_call_operand.vmem [shape: bf16[144,128], index: 1, kind: input, shape index: {}]
  %s2 = inlined_call_operand.vmem [shape: f32[2,128], index: 2, kind: input, shape index: {}]
  %s3 = inlined_call_operand.vmem [shape: f32[512,8], index: 3, kind: output, shape index: {}]
  %s4 = sld [smem:[#allocation0]]
  $region60: #{tpu_custom_call.1} parent=0
    _
  %s6 = ssub.s32 1, %s4
  %s7 = scalar_select 0, %s6, %s4
  loop: start=0, step=1, limit=6
  $region2: #{tpu_custom_call.1} parent=0 // loop_pre_header
    _
  $region3: #{tpu_custom_call.1} parent=0 // loop_header
    %s9 = sphi 0, %s13
    %p10 = scmp.ge.s32.totalorder %s9, 6
    %s16 = sphi 0, %s28
    %s17 = sphi 0, %s24
    %s18 = sphi 0, %s16
    %s19 = sphi 0, %s17
    %s20 = sphi 0, %s18
    %s21 = sphi 0, %s19
    %s31 = sphi 0, %s33
    %s34 = sphi 0, %s31
    %s35 = sphi 0, %s34
    %s51 = sphi 0, %s35
    %s55 = sphi 0, %s55
    %s57 = sphi 0, %s55
    %s58 = sphi 0, %s57
    %s72 = sphi 0, %s58
    %s76 = sphi 0, %s76
    %s78 = sphi 0, %s76
    %s79 = sphi 0, %s78
    %s93 = sphi 0, %s79
    %s97 = sphi 0, %s97
    %s99 = sphi 0, %s97
    %s100 = sphi 0, %s99
    %s114 = sphi 0, %s100
  $region4: #{tpu_custom_call.1} parent=0 // loop_header_branch
    %12 = sbr.rel (%p10) target = $region8
  $region5: #{tpu_custom_call.1} parent=0 // loop_body
    %s14 = ssub.s32 %s9, 1
    %s15 = ssub.s32 %s9, 2
    %s22 = sadd.s32 1, %s17
    %p23 = scmp.ge.s32.totalorder %s22, 2
    %s24 = scalar_select %p23, 0, %s22
    %s25 = sadd.s32 1, %s16
    %s26 = scalar_select %p23, %s25, %s16
    %p27 = scmp.ge.s32.totalorder %s26, 2
    %s28 = scalar_select %p27, 0, %s26
    %s29 = ssub.s32 %s16, %s28
    %p30 = scmp.eq.s32.totalorder %s29, 0
    %s32 = sadd.s32 %s31, 1
    %s33 = scalar_select %p30, %s31, %s32
    %p36 = pneg %p30
    %p37 = scmp.eq.s32.totalorder %s9, 3
    %p38 = por %p36, %p37
    %p39 = scmp.ne.s32.totalorder %s31, %s34
    %p40 = scmp.eq.s32.totalorder %s9, 0
    %p41 = por %p39, %p40
    %p42 = scmp.ne.s32.totalorder %s31, %s34
    %p43 = scmp.eq.s32.totalorder %s14, 3
    %p44 = por %p42, %p43
    %p45 = scmp.ne.s32.totalorder %s34, %s35
    %p46 = scmp.eq.s32.totalorder %s14, 0
    %p47 = por %p45, %p46
    %p48 = scmp.ne.s32.totalorder %s34, %s35
    %p49 = scmp.eq.s32.totalorder %s15, 3
    %p50 = por %p48, %p49
    %p52 = scmp.ne.s32.totalorder %s35, %s51
    %p53 = scmp.eq.s32.totalorder %s15, 0
    %p54 = por %p52, %p53
    %s56 = sadd.s32 %s55, 1
    %p59 = scmp.eq.s32.totalorder %s9, 3
    %p60 = scmp.ne.s32.totalorder %s55, %s57
    %p61 = scmp.eq.s32.totalorder %s9, 0
    %p62 = por %p60, %p61
    %p63 = scmp.ne.s32.totalorder %s55, %s57
    %p64 = scmp.eq.s32.totalorder %s14, 3
    %p65 = por %p63, %p64
    %p66 = scmp.ne.s32.totalorder %s57, %s58
    %p67 = scmp.eq.s32.totalorder %s14, 0
    %p68 = por %p66, %p67
    %p69 = scmp.ne.s32.totalorder %s57, %s58
    %p70 = scmp.eq.s32.totalorder %s15, 3
    %p71 = por %p69, %p70
    %p73 = scmp.ne.s32.totalorder %s58, %s72
    %p74 = scmp.eq.s32.totalorder %s15, 0
    %p75 = por %p73, %p74
    %s77 = sadd.s32 %s76, 1
    %p80 = scmp.eq.s32.totalorder %s9, 3
    %p81 = scmp.ne.s32.totalorder %s76, %s78
    %p82 = scmp.eq.s32.totalorder %s9, 0
    %p83 = por %p81, %p82
    %p84 = scmp.ne.s32.totalorder %s76, %s78
    %p85 = scmp.eq.s32.totalorder %s14, 3
    %p86 = por %p84, %p85
    %p87 = scmp.ne.s32.totalorder %s78, %s79
    %p88 = scmp.eq.s32.totalorder %s14, 0
    %p89 = por %p87, %p88
    %p90 = scmp.ne.s32.totalorder %s78, %s79
    %p91 = scmp.eq.s32.totalorder %s15, 3
    %p92 = por %p90, %p91
    %p94 = scmp.ne.s32.totalorder %s79, %s93
    %p95 = scmp.eq.s32.totalorder %s15, 0
    %p96 = por %p94, %p95
    %s98 = sadd.s32 %s97, 1
    %p101 = scmp.eq.s32.totalorder %s9, 3
    %p102 = scmp.ne.s32.totalorder %s97, %s99
    %p103 = scmp.eq.s32.totalorder %s9, 0
    %p104 = por %p102, %p103
    %p105 = scmp.ne.s32.totalorder %s97, %s99
    %p106 = scmp.eq.s32.totalorder %s14, 3
    %p107 = por %p105, %p106
    %p108 = scmp.ne.s32.totalorder %s99, %s100
    %p109 = scmp.eq.s32.totalorder %s14, 0
    %p110 = por %p108, %p109
    %p111 = scmp.ne.s32.totalorder %s99, %s100
    %p112 = scmp.eq.s32.totalorder %s15, 3
    %p113 = por %p111, %p112
    %p115 = scmp.ne.s32.totalorder %s100, %s114
    %p116 = scmp.eq.s32.totalorder %s15, 0
    %p117 = por %p115, %p116
    %p118 = scmp.le.s32.totalorder 1, %s9
    %p119 = scmp.lt.s32.totalorder %s9, 5
    %p120 = pnand %p118, %p119
    %p121 = pneg %p120
    // Predicated region
    $region9: #{tpu_custom_call.1} parent=5 // pred_check
      _
    $region10: #{tpu_custom_call.1} parent=5 // pred_check_branch
      %123 = sbr.rel (%p120) target = $region12
    $region11: #{tpu_custom_call.1} parent=5 // pred_region
      %s124 = ssub.s32 %s9, 1
      // Predicated region
      $region13: #{tpu_custom_call.1} parent=11 // pred_check
        %p125 = pneg %p68
      $region14: #{tpu_custom_call.1} parent=11 // pred_check_branch
        %127 = sbr.rel (%p125) target = $region16
      $region15: #{tpu_custom_call.1} parent=11 // pred_region
        _
      $region16: #{tpu_custom_call.1} parent=11 // pred_fallthru
        _
      // Predicated region
      $region17: #{tpu_custom_call.1} parent=11 // pred_check
        %p128 = pneg %p89
      $region18: #{tpu_custom_call.1} parent=11 // pred_check_branch
        %130 = sbr.rel (%p128) target = $region20
      $region19: #{tpu_custom_call.1} parent=11 // pred_region
        _
      $region20: #{tpu_custom_call.1} parent=11 // pred_fallthru
        _
    $region12: #{tpu_custom_call.1} parent=5 // pred_fallthru
      _
    %p131 = scmp.lt.s32.totalorder %s9, 4
    // Predicated region
    $region21: #{tpu_custom_call.1} parent=5 // pred_check
      %p132 = pneg %p131
    $region22: #{tpu_custom_call.1} parent=5 // pred_check_branch
      %134 = sbr.rel (%p132) target = $region24
    $region23: #{tpu_custom_call.1} parent=5 // pred_region
      // Predicated region
      $region25: #{tpu_custom_call.1} parent=23 // pred_check
        %p135 = pneg %p41
      $region26: #{tpu_custom_call.1} parent=23 // pred_check_branch
        %137 = sbr.rel (%p135) target = $region28
      $region27: #{tpu_custom_call.1} parent=23 // pred_region
        %p138 = scmp.lt.s32.totalorder %s16, 1
        %s139 = scalar_select %p138, %s16, 1
        %s140 = smul.addr %s139, 54
        %s141 = smul.addr %s140, 4
        %s142 = scalar_lea.vmem %s0, %s141
      $region28: #{tpu_custom_call.1} parent=23 // pred_fallthru
        _
    $region24: #{tpu_custom_call.1} parent=5 // pred_fallthru
      _
    %p143 = scmp.le.s32.totalorder 1, %s9
    %p144 = scmp.lt.s32.totalorder %s9, 5
    %p145 = pnand %p143, %p144
    %p146 = pneg %p145
    // Predicated region
    $region29: #{tpu_custom_call.1} parent=5 // pred_check
      _
    $region30: #{tpu_custom_call.1} parent=5 // pred_check_branch
      %148 = sbr.rel (%p145) target = $region32
    $region31: #{tpu_custom_call.1} parent=5 // pred_region
      %s149 = ssub.s32 %s9, 1
      %p150 = scmp.lt.s32.totalorder %s18, 1
      %s151 = scalar_select %p150, %s18, 1
      %s152 = smul.addr %s151, 54
      %s153 = smul.addr %s152, 4
      %s154 = scalar_lea.vmem %s0, %s153
      %p155 = pneg %p47
      %p156 = pneg %p44
      %p157 = pneg %p68
      %p158 = pneg %p65
      %p159 = pneg %p89
      %p160 = pneg %p86
      %p161 = pneg %p110
      %p162 = pneg %p107
      %p163 = scmp.lt.s32.totalorder %s18, 1
      %s164 = scalar_select %p163, %s18, 1
      %s165 = smul.addr %s164, 54
      %s166 = smul.addr %s165, 4
      %s167 = scalar_lea.vmem %s0, %s166
      %s169 = smul.u32 %s19, 8
      %s170 = smul.u32 %s169, 3
      %s171 = smul.addr %s170, 4
      %s172 = scalar_lea.vmem %s167, %s171
      %v173 = vld [vmem:[%s172] sm:$0xf]
      %v174 = vld [vmem:[%s172 + $0x4] sm:$0xf]
      %v175 = vld [vmem:[%s172 + $0xc] sm:$0xf]
      %v176 = vld [vmem:[%s172 + $0x10] sm:$0xf]
      %v177 = vld [vmem:[%s172 + $0x18] sm:$0xf]
      %v178 = vld [vmem:[%s172 + $0x1c] sm:$0xf]
      %v179 = vld [vmem:[%s172 + $0x24] sm:$0xf]
      %v180 = vld [vmem:[%s172 + $0x28] sm:$0xf]
      %v181 = vld [vmem:[%s172 + $0x30] sm:$0xf]
      %v182 = vld [vmem:[%s172 + $0x34] sm:$0xf]
      %v183 = vld [vmem:[%s172 + $0x3c] sm:$0xf]
      %v184 = vld [vmem:[%s172 + $0x40] sm:$0xf]
      %v185 = vld [vmem:[%s172 + $0x48] sm:$0xf]
      %v186 = vld [vmem:[%s172 + $0x4c] sm:$0xf]
      %v187 = vld [vmem:[%s172 + $0x54] sm:$0xf]
      %v188 = vld [vmem:[%s172 + $0x58] sm:$0xf]
      %v189 = vld [vmem:[%s172 + $0x8] sm:$0x1]
      %v190 = vld [vmem:[%s172 + $0x14] sm:$0x1]
      %v191 = vld [vmem:[%s172 + $0x20] sm:$0x1]
      %v192 = vld [vmem:[%s172 + $0x2c] sm:$0x1]
      %v193 = vld [vmem:[%s172 + $0x38] sm:$0x1]
      %v194 = vld [vmem:[%s172 + $0x44] sm:$0x1]
      %v195 = vld [vmem:[%s172 + $0x50] sm:$0x1]
      %v196 = vld [vmem:[%s172 + $0x5c] sm:$0x1]
      %vm197 = vsmask.f32 3328
      %vm198 = vsmask.f32 7440
      %vm199 = vmor %vm197, %vm198
      %v201 = vshrl.u32 %v173, 16
      %v203 = vrot.slane %v201, 4
      %v204 = vshll.u32 %v173, 16
      %v206 = vrot.slane %v204, 5
      %v207 = vor.u32 %v203, %v206
      %v208 = vrot.slane %v207, 4
      %v210 = vshll.u32 %v174, 16
      %v212 = vrot.slane %v210, 5
      %v213 = vsel %vm199, %v208, %v212
      %v214 = vshrl.u32 %v174, 16
      %v216 = vrot.slane %v214, 4
      %v217 = vor.u32 %v216, %v212
      %v218 = vrot.slane %v217, 4
      %v220 = vshll.u32 %v189, 16
      %v222 = vrot.slane %v220, 5
      %v223 = vsel %vm199, %v218, %v222
      %v225 = vshrl.u32 %v175, 16
      %v227 = vrot.slane %v225, 4
      %v228 = vshll.u32 %v175, 16
      %v230 = vrot.slane %v228, 5
      %v231 = vor.u32 %v227, %v230
      %v232 = vrot.slane %v231, 4
      %v234 = vshll.u32 %v176, 16
      %v236 = vrot.slane %v234, 5
      %v237 = vsel %vm199, %v232, %v236
      %v238 = vshrl.u32 %v176, 16
      %v240 = vrot.slane %v238, 4
      %v241 = vor.u32 %v240, %v236
      %v242 = vrot.slane %v241, 4
      %v244 = vshll.u32 %v190, 16
      %v246 = vrot.slane %v244, 5
      %v247 = vsel %vm199, %v242, %v246
      %v249 = vshrl.u32 %v177, 16
      %v251 = vrot.slane %v249, 4
      %v252 = vshll.u32 %v177, 16
      %v254 = vrot.slane %v252, 5
      %v255 = vor.u32 %v251, %v254
      %v256 = vrot.slane %v255, 4
      %v258 = vshll.u32 %v178, 16
      %v260 = vrot.slane %v258, 5
      %v261 = vsel %vm199, %v256, %v260
      %v262 = vshrl.u32 %v178, 16
      %v264 = vrot.slane %v262, 4
      %v265 = vor.u32 %v264, %v260
      %v266 = vrot.slane %v265, 4
      %v268 = vshll.u32 %v191, 16
      %v270 = vrot.slane %v268, 5
      %v271 = vsel %vm199, %v266, %v270
      %v273 = vshrl.u32 %v179, 16
      %v275 = vrot.slane %v273, 4
      %v276 = vshll.u32 %v179, 16
      %v278 = vrot.slane %v276, 5
      %v279 = vor.u32 %v275, %v278
      %v280 = vrot.slane %v279, 4
      %v282 = vshll.u32 %v180, 16
      %v284 = vrot.slane %v282, 5
      %v285 = vsel %vm199, %v280, %v284
      %v286 = vshrl.u32 %v180, 16
      %v288 = vrot.slane %v286, 4
      %v289 = vor.u32 %v288, %v284
      %v290 = vrot.slane %v289, 4
      %v292 = vshll.u32 %v192, 16
      %v294 = vrot.slane %v292, 5
      %v295 = vsel %vm199, %v290, %v294
      %v297 = vshrl.u32 %v181, 16
      %v299 = vrot.slane %v297, 4
      %v300 = vshll.u32 %v181, 16
      %v302 = vrot.slane %v300, 5
      %v303 = vor.u32 %v299, %v302
      %v304 = vrot.slane %v303, 4
      %v306 = vshll.u32 %v182, 16
      %v308 = vrot.slane %v306, 5
      %v309 = vsel %vm199, %v304, %v308
      %v310 = vshrl.u32 %v182, 16
      %v312 = vrot.slane %v310, 4
      %v313 = vor.u32 %v312, %v308
      %v314 = vrot.slane %v313, 4
      %v316 = vshll.u32 %v193, 16
      %v318 = vrot.slane %v316, 5
      %v319 = vsel %vm199, %v314, %v318
      %v321 = vshrl.u32 %v183, 16
      %v323 = vrot.slane %v321, 4
      %v324 = vshll.u32 %v183, 16
      %v326 = vrot.slane %v324, 5
      %v327 = vor.u32 %v323, %v326
      %v328 = vrot.slane %v327, 4
      %v330 = vshll.u32 %v184, 16
      %v332 = vrot.slane %v330, 5
      %v333 = vsel %vm199, %v328, %v332
      %v334 = vshrl.u32 %v184, 16
      %v336 = vrot.slane %v334, 4
      %v337 = vor.u32 %v336, %v332
      %v338 = vrot.slane %v337, 4
      %v340 = vshll.u32 %v194, 16
      %v342 = vrot.slane %v340, 5
      %v343 = vsel %vm199, %v338, %v342
      %v345 = vshrl.u32 %v185, 16
      %v347 = vrot.slane %v345, 4
      %v348 = vshll.u32 %v185, 16
      %v350 = vrot.slane %v348, 5
      %v351 = vor.u32 %v347, %v350
      %v352 = vrot.slane %v351, 4
      %v354 = vshll.u32 %v186, 16
      %v356 = vrot.slane %v354, 5
      %v357 = vsel %vm199, %v352, %v356
      %v358 = vshrl.u32 %v186, 16
      %v360 = vrot.slane %v358, 4
      %v361 = vor.u32 %v360, %v356
      %v362 = vrot.slane %v361, 4
      %v364 = vshll.u32 %v195, 16
      %v366 = vrot.slane %v364, 5
      %v367 = vsel %vm199, %v362, %v366
      %v369 = vshrl.u32 %v187, 16
      %v371 = vrot.slane %v369, 4
      %v372 = vshll.u32 %v187, 16
      %v374 = vrot.slane %v372, 5
      %v375 = vor.u32 %v371, %v374
      %v376 = vrot.slane %v375, 4
      %v378 = vshll.u32 %v188, 16
      %v380 = vrot.slane %v378, 5
      %v381 = vsel %vm199, %v376, %v380
      %v382 = vshrl.u32 %v188, 16
      %v384 = vrot.slane %v382, 4
      %v385 = vor.u32 %v384, %v380
      %v386 = vrot.slane %v385, 4
      %v388 = vshll.u32 %v196, 16
      %v390 = vrot.slane %v388, 5
      %v391 = vsel %vm199, %v386, %v390
      %v392 = vld [vmem:[%s172] sm:$0xe]
      %v393 = vld [vmem:[%s172 + $0xc] sm:$0xe]
      %v394 = vld [vmem:[%s172 + $0x18] sm:$0xe]
      %v395 = vld [vmem:[%s172 + $0x24] sm:$0xe]
      %v396 = vld [vmem:[%s172 + $0x30] sm:$0xe]
      %v397 = vld [vmem:[%s172 + $0x3c] sm:$0xe]
      %v398 = vld [vmem:[%s172 + $0x48] sm:$0xe]
      %v399 = vld [vmem:[%s172 + $0x54] sm:$0xe]
      %vm424 = vcmask 1042432
      %vm425 = vcmask 1046532
      %vm426 = vmor %vm424, %vm425
      %v427 = vrot.slane %v392, 5
      %v428 = vrot.slane %v427, 4
      %v429 = vrot.slane %v174, 5
      %v430 = vsel %vm426, %v428, %v429
      %v431 = vrot.slane %v429, 4
      %v432 = vrot.slane %v189, 5
      %v433 = vsel %vm426, %v431, %v432
      %v434 = vrot.slane %v393, 5
      %v435 = vrot.slane %v434, 4
      %v436 = vrot.slane %v176, 5
      %v437 = vsel %vm426, %v435, %v436
      %v438 = vrot.slane %v436, 4
      %v439 = vrot.slane %v190, 5
      %v440 = vsel %vm426, %v438, %v439
      %v441 = vrot.slane %v394, 5
      %v442 = vrot.slane %v441, 4
      %v443 = vrot.slane %v178, 5
      %v444 = vsel %vm426, %v442, %v443
      %v445 = vrot.slane %v443, 4
      %v446 = vrot.slane %v191, 5
      %v447 = vsel %vm426, %v445, %v446
      %v448 = vrot.slane %v395, 5
      %v449 = vrot.slane %v448, 4
      %v450 = vrot.slane %v180, 5
      %v451 = vsel %vm426, %v449, %v450
      %v452 = vrot.slane %v450, 4
      %v453 = vrot.slane %v192, 5
      %v454 = vsel %vm426, %v452, %v453
      %v455 = vrot.slane %v396, 5
      %v456 = vrot.slane %v455, 4
      %v457 = vrot.slane %v182, 5
      %v458 = vsel %vm426, %v456, %v457
      %v459 = vrot.slane %v457, 4
      %v460 = vrot.slane %v193, 5
      %v461 = vsel %vm426, %v459, %v460
      %v462 = vrot.slane %v397, 5
      %v463 = vrot.slane %v462, 4
      %v464 = vrot.slane %v184, 5
      %v465 = vsel %vm426, %v463, %v464
      %v466 = vrot.slane %v464, 4
      %v467 = vrot.slane %v194, 5
      %v468 = vsel %vm426, %v466, %v467
      %v469 = vrot.slane %v398, 5
      %v470 = vrot.slane %v469, 4
      %v471 = vrot.slane %v186, 5
      %v472 = vsel %vm426, %v470, %v471
      %v473 = vrot.slane %v471, 4
      %v474 = vrot.slane %v195, 5
      %v475 = vsel %vm426, %v473, %v474
      %v476 = vrot.slane %v399, 5
      %v477 = vrot.slane %v476, 4
      %v478 = vrot.slane %v188, 5
      %v479 = vsel %vm426, %v477, %v478
      %v480 = vrot.slane %v478, 4
      %v481 = vrot.slane %v196, 5
      %v482 = vsel %vm426, %v480, %v481
      %s483 = sadd.s32 %s169, 1
      %s484 = smul.u32 %s483, 3
      %s485 = smul.addr %s484, 4
      %s486 = scalar_lea.vmem %s167, %s485
      %v487 = vld [vmem:[%s486] sm:$0xf]
      %v488 = vld [vmem:[%s486 + $0x4] sm:$0xf]
      %v489 = vld [vmem:[%s486 + $0xc] sm:$0xf]
      %v490 = vld [vmem:[%s486 + $0x10] sm:$0xf]
      %v491 = vld [vmem:[%s486 + $0x18] sm:$0xf]
      %v492 = vld [vmem:[%s486 + $0x1c] sm:$0xf]
      %v493 = vld [vmem:[%s486 + $0x24] sm:$0xf]
      %v494 = vld [vmem:[%s486 + $0x28] sm:$0xf]
      %v495 = vld [vmem:[%s486 + $0x30] sm:$0xf]
      %v496 = vld [vmem:[%s486 + $0x34] sm:$0xf]
      %v497 = vld [vmem:[%s486 + $0x3c] sm:$0xf]
      %v498 = vld [vmem:[%s486 + $0x40] sm:$0xf]
      %v499 = vld [vmem:[%s486 + $0x48] sm:$0xf]
      %v500 = vld [vmem:[%s486 + $0x4c] sm:$0xf]
      %v501 = vld [vmem:[%s486 + $0x54] sm:$0xf]
      %v502 = vld [vmem:[%s486 + $0x58] sm:$0xf]
      %v503 = vld [vmem:[%s486 + $0x8] sm:$0x1]
      %v504 = vld [vmem:[%s486 + $0x14] sm:$0x1]
      %v505 = vld [vmem:[%s486 + $0x20] sm:$0x1]
      %v506 = vld [vmem:[%s486 + $0x2c] sm:$0x1]
      %v507 = vld [vmem:[%s486 + $0x38] sm:$0x1]
      %v508 = vld [vmem:[%s486 + $0x44] sm:$0x1]
      %v509 = vld [vmem:[%s486 + $0x50] sm:$0x1]
      %v510 = vld [vmem:[%s486 + $0x5c] sm:$0x1]
      %v512 = vshrl.u32 %v487, 16
      %v514 = vrot.slane %v512, 4
      %v515 = vshll.u32 %v487, 16
      %v517 = vrot.slane %v515, 5
      %v518 = vor.u32 %v514, %v517
      %v519 = vrot.slane %v518, 4
      %v521 = vshll.u32 %v488, 16
      %v523 = vrot.slane %v521, 5
      %v524 = vsel %vm199, %v519, %v523
      %v525 = vshrl.u32 %v488, 16
      %v527 = vrot.slane %v525, 4
      %v528 = vor.u32 %v527, %v523
      %v529 = vrot.slane %v528, 4
      %v531 = vshll.u32 %v503, 16
      %v533 = vrot.slane %v531, 5
      %v534 = vsel %vm199, %v529, %v533
      %v536 = vshrl.u32 %v489, 16
      %v538 = vrot.slane %v536, 4
      %v539 = vshll.u32 %v489, 16
      %v541 = vrot.slane %v539, 5
      %v542 = vor.u32 %v538, %v541
      %v543 = vrot.slane %v542, 4
      %v545 = vshll.u32 %v490, 16
      %v547 = vrot.slane %v545, 5
      %v548 = vsel %vm199, %v543, %v547
      %v549 = vshrl.u32 %v490, 16
      %v551 = vrot.slane %v549, 4
      %v552 = vor.u32 %v551, %v547
      %v553 = vrot.slane %v552, 4
      %v555 = vshll.u32 %v504, 16
      %v557 = vrot.slane %v555, 5
      %v558 = vsel %vm199, %v553, %v557
      %v560 = vshrl.u32 %v491, 16
      %v562 = vrot.slane %v560, 4
      %v563 = vshll.u32 %v491, 16
      %v565 = vrot.slane %v563, 5
      %v566 = vor.u32 %v562, %v565
      %v567 = vrot.slane %v566, 4
      %v569 = vshll.u32 %v492, 16
      %v571 = vrot.slane %v569, 5
      %v572 = vsel %vm199, %v567, %v571
      %v573 = vshrl.u32 %v492, 16
      %v575 = vrot.slane %v573, 4
      %v576 = vor.u32 %v575, %v571
      %v577 = vrot.slane %v576, 4
      %v579 = vshll.u32 %v505, 16
      %v581 = vrot.slane %v579, 5
      %v582 = vsel %vm199, %v577, %v581
      %v584 = vshrl.u32 %v493, 16
      %v586 = vrot.slane %v584, 4
      %v587 = vshll.u32 %v493, 16
      %v589 = vrot.slane %v587, 5
      %v590 = vor.u32 %v586, %v589
      %v591 = vrot.slane %v590, 4
      %v593 = vshll.u32 %v494, 16
      %v595 = vrot.slane %v593, 5
      %v596 = vsel %vm199, %v591, %v595
      %v597 = vshrl.u32 %v494, 16
      %v599 = vrot.slane %v597, 4
      %v600 = vor.u32 %v599, %v595
      %v601 = vrot.slane %v600, 4
      %v603 = vshll.u32 %v506, 16
      %v605 = vrot.slane %v603, 5
      %v606 = vsel %vm199, %v601, %v605
      %v608 = vshrl.u32 %v495, 16
      %v610 = vrot.slane %v608, 4
      %v611 = vshll.u32 %v495, 16
      %v613 = vrot.slane %v611, 5
      %v614 = vor.u32 %v610, %v613
      %v615 = vrot.slane %v614, 4
      %v617 = vshll.u32 %v496, 16
      %v619 = vrot.slane %v617, 5
      %v620 = vsel %vm199, %v615, %v619
      %v621 = vshrl.u32 %v496, 16
      %v623 = vrot.slane %v621, 4
      %v624 = vor.u32 %v623, %v619
      %v625 = vrot.slane %v624, 4
      %v627 = vshll.u32 %v507, 16
      %v629 = vrot.slane %v627, 5
      %v630 = vsel %vm199, %v625, %v629
      %v632 = vshrl.u32 %v497, 16
      %v634 = vrot.slane %v632, 4
      %v635 = vshll.u32 %v497, 16
      %v637 = vrot.slane %v635, 5
      %v638 = vor.u32 %v634, %v637
      %v639 = vrot.slane %v638, 4
      %v641 = vshll.u32 %v498, 16
      %v643 = vrot.slane %v641, 5
      %v644 = vsel %vm199, %v639, %v643
      %v645 = vshrl.u32 %v498, 16
      %v647 = vrot.slane %v645, 4
      %v648 = vor.u32 %v647, %v643
      %v649 = vrot.slane %v648, 4
      %v651 = vshll.u32 %v508, 16
      %v653 = vrot.slane %v651, 5
      %v654 = vsel %vm199, %v649, %v653
      %v656 = vshrl.u32 %v499, 16
      %v658 = vrot.slane %v656, 4
      %v659 = vshll.u32 %v499, 16
      %v661 = vrot.slane %v659, 5
      %v662 = vor.u32 %v658, %v661
      %v663 = vrot.slane %v662, 4
      %v665 = vshll.u32 %v500, 16
      %v667 = vrot.slane %v665, 5
      %v668 = vsel %vm199, %v663, %v667
      %v669 = vshrl.u32 %v500, 16
      %v671 = vrot.slane %v669, 4
      %v672 = vor.u32 %v671, %v667
      %v673 = vrot.slane %v672, 4
      %v675 = vshll.u32 %v509, 16
      %v677 = vrot.slane %v675, 5
      %v678 = vsel %vm199, %v673, %v677
      %v680 = vshrl.u32 %v501, 16
      %v682 = vrot.slane %v680, 4
      %v683 = vshll.u32 %v501, 16
      %v685 = vrot.slane %v683, 5
      %v686 = vor.u32 %v682, %v685
      %v687 = vrot.slane %v686, 4
      %v689 = vshll.u32 %v502, 16
      %v691 = vrot.slane %v689, 5
      %v692 = vsel %vm199, %v687, %v691
      %v693 = vshrl.u32 %v502, 16
      %v695 = vrot.slane %v693, 4
      %v696 = vor.u32 %v695, %v691
      %v697 = vrot.slane %v696, 4
      %v699 = vshll.u32 %v510, 16
      %v701 = vrot.slane %v699, 5
      %v702 = vsel %vm199, %v697, %v701
      %v703 = vld [vmem:[%s486] sm:$0xe]
      %v704 = vld [vmem:[%s486 + $0xc] sm:$0xe]
      %v705 = vld [vmem:[%s486 + $0x18] sm:$0xe]
      %v706 = vld [vmem:[%s486 + $0x24] sm:$0xe]
      %v707 = vld [vmem:[%s486 + $0x30] sm:$0xe]
      %v708 = vld [vmem:[%s486 + $0x3c] sm:$0xe]
      %v709 = vld [vmem:[%s486 + $0x48] sm:$0xe]
      %v710 = vld [vmem:[%s486 + $0x54] sm:$0xe]
      %v735 = vrot.slane %v703, 5
      %v736 = vrot.slane %v735, 4
      %v737 = vrot.slane %v488, 5
      %v738 = vsel %vm426, %v736, %v737
      %v739 = vrot.slane %v737, 4
      %v740 = vrot.slane %v503, 5
      %v741 = vsel %vm426, %v739, %v740
      %v742 = vrot.slane %v704, 5
      %v743 = vrot.slane %v742, 4
      %v744 = vrot.slane %v490, 5
      %v745 = vsel %vm426, %v743, %v744
      %v746 = vrot.slane %v744, 4
      %v747 = vrot.slane %v504, 5
      %v748 = vsel %vm426, %v746, %v747
      %v749 = vrot.slane %v705, 5
      %v750 = vrot.slane %v749, 4
      %v751 = vrot.slane %v492, 5
      %v752 = vsel %vm426, %v750, %v751
      %v753 = vrot.slane %v751, 4
      %v754 = vrot.slane %v505, 5
      %v755 = vsel %vm426, %v753, %v754
      %v756 = vrot.slane %v706, 5
      %v757 = vrot.slane %v756, 4
      %v758 = vrot.slane %v494, 5
      %v759 = vsel %vm426, %v757, %v758
      %v760 = vrot.slane %v758, 4
      %v761 = vrot.slane %v506, 5
      %v762 = vsel %vm426, %v760, %v761
      %v763 = vrot.slane %v707, 5
      %v764 = vrot.slane %v763, 4
      %v765 = vrot.slane %v496, 5
      %v766 = vsel %vm426, %v764, %v765
      %v767 = vrot.slane %v765, 4
      %v768 = vrot.slane %v507, 5
      %v769 = vsel %vm426, %v767, %v768
      %v770 = vrot.slane %v708, 5
      %v771 = vrot.slane %v770, 4
      %v772 = vrot.slane %v498, 5
      %v773 = vsel %vm426, %v771, %v772
      %v774 = vrot.slane %v772, 4
      %v775 = vrot.slane %v508, 5
      %v776 = vsel %vm426, %v774, %v775
      %v777 = vrot.slane %v709, 5
      %v778 = vrot.slane %v777, 4
      %v779 = vrot.slane %v500, 5
      %v780 = vsel %vm426, %v778, %v779
      %v781 = vrot.slane %v779, 4
      %v782 = vrot.slane %v509, 5
      %v783 = vsel %vm426, %v781, %v782
      %v784 = vrot.slane %v710, 5
      %v785 = vrot.slane %v784, 4
      %v786 = vrot.slane %v502, 5
      %v787 = vsel %vm426, %v785, %v786
      %v788 = vrot.slane %v786, 4
      %v789 = vrot.slane %v510, 5
      %v790 = vsel %vm426, %v788, %v789
      %s791 = sadd.s32 %s169, 2
      %s792 = smul.u32 %s791, 3
      %s793 = smul.addr %s792, 4
      %s794 = scalar_lea.vmem %s167, %s793
      %v795 = vld [vmem:[%s794] sm:$0xf]
      %v796 = vld [vmem:[%s794 + $0x4] sm:$0xf]
      %v797 = vld [vmem:[%s794 + $0xc] sm:$0xf]
      %v798 = vld [vmem:[%s794 + $0x10] sm:$0xf]
      %v799 = vld [vmem:[%s794 + $0x18] sm:$0xf]
      %v800 = vld [vmem:[%s794 + $0x1c] sm:$0xf]
      %v801 = vld [vmem:[%s794 + $0x24] sm:$0xf]
      %v802 = vld [vmem:[%s794 + $0x28] sm:$0xf]
      %v803 = vld [vmem:[%s794 + $0x30] sm:$0xf]
      %v804 = vld [vmem:[%s794 + $0x34] sm:$0xf]
      %v805 = vld [vmem:[%s794 + $0x3c] sm:$0xf]
      %v806 = vld [vmem:[%s794 + $0x40] sm:$0xf]
      %v807 = vld [vmem:[%s794 + $0x48] sm:$0xf]
      %v808 = vld [vmem:[%s794 + $0x4c] sm:$0xf]
      %v809 = vld [vmem:[%s794 + $0x54] sm:$0xf]
      %v810 = vld [vmem:[%s794 + $0x58] sm:$0xf]
      %v811 = vld [vmem:[%s794 + $0x8] sm:$0x1]
      %v812 = vld [vmem:[%s794 + $0x14] sm:$0x1]
      %v813 = vld [vmem:[%s794 + $0x20] sm:$0x1]
      %v814 = vld [vmem:[%s794 + $0x2c] sm:$0x1]
      %v815 = vld [vmem:[%s794 + $0x38] sm:$0x1]
      %v816 = vld [vmem:[%s794 + $0x44] sm:$0x1]
      %v817 = vld [vmem:[%s794 + $0x50] sm:$0x1]
      %v818 = vld [vmem:[%s794 + $0x5c] sm:$0x1]
      %v820 = vshrl.u32 %v795, 16
      %v822 = vrot.slane %v820, 4
      %v823 = vshll.u32 %v795, 16
      %v825 = vrot.slane %v823, 5
      %v826 = vor.u32 %v822, %v825
      %v827 = vrot.slane %v826, 4
      %v829 = vshll.u32 %v796, 16
      %v831 = vrot.slane %v829, 5
      %v832 = vsel %vm199, %v827, %v831
      %v833 = vshrl.u32 %v796, 16
      %v835 = vrot.slane %v833, 4
      %v836 = vor.u32 %v835, %v831
      %v837 = vrot.slane %v836, 4
      %v839 = vshll.u32 %v811, 16
      %v841 = vrot.slane %v839, 5
      %v842 = vsel %vm199, %v837, %v841
      %v844 = vshrl.u32 %v797, 16
      %v846 = vrot.slane %v844, 4
      %v847 = vshll.u32 %v797, 16
      %v849 = vrot.slane %v847, 5
      %v850 = vor.u32 %v846, %v849
      %v851 = vrot.slane %v850, 4
      %v853 = vshll.u32 %v798, 16
      %v855 = vrot.slane %v853, 5
      %v856 = vsel %vm199, %v851, %v855
      %v857 = vshrl.u32 %v798, 16
      %v859 = vrot.slane %v857, 4
      %v860 = vor.u32 %v859, %v855
      %v861 = vrot.slane %v860, 4
      %v863 = vshll.u32 %v812, 16
      %v865 = vrot.slane %v863, 5
      %v866 = vsel %vm199, %v861, %v865
      %v868 = vshrl.u32 %v799, 16
      %v870 = vrot.slane %v868, 4
      %v871 = vshll.u32 %v799, 16
      %v873 = vrot.slane %v871, 5
      %v874 = vor.u32 %v870, %v873
      %v875 = vrot.slane %v874, 4
      %v877 = vshll.u32 %v800, 16
      %v879 = vrot.slane %v877, 5
      %v880 = vsel %vm199, %v875, %v879
      %v881 = vshrl.u32 %v800, 16
      %v883 = vrot.slane %v881, 4
      %v884 = vor.u32 %v883, %v879
      %v885 = vrot.slane %v884, 4
      %v887 = vshll.u32 %v813, 16
      %v889 = vrot.slane %v887, 5
      %v890 = vsel %vm199, %v885, %v889
      %v892 = vshrl.u32 %v801, 16
      %v894 = vrot.slane %v892, 4
      %v895 = vshll.u32 %v801, 16
      %v897 = vrot.slane %v895, 5
      %v898 = vor.u32 %v894, %v897
      %v899 = vrot.slane %v898, 4
      %v901 = vshll.u32 %v802, 16
      %v903 = vrot.slane %v901, 5
      %v904 = vsel %vm199, %v899, %v903
      %v905 = vshrl.u32 %v802, 16
      %v907 = vrot.slane %v905, 4
      %v908 = vor.u32 %v907, %v903
      %v909 = vrot.slane %v908, 4
      %v911 = vshll.u32 %v814, 16
      %v913 = vrot.slane %v911, 5
      %v914 = vsel %vm199, %v909, %v913
      %v916 = vshrl.u32 %v803, 16
      %v918 = vrot.slane %v916, 4
      %v919 = vshll.u32 %v803, 16
      %v921 = vrot.slane %v919, 5
      %v922 = vor.u32 %v918, %v921
      %v923 = vrot.slane %v922, 4
      %v925 = vshll.u32 %v804, 16
      %v927 = vrot.slane %v925, 5
      %v928 = vsel %vm199, %v923, %v927
      %v929 = vshrl.u32 %v804, 16
      %v931 = vrot.slane %v929, 4
      %v932 = vor.u32 %v931, %v927
      %v933 = vrot.slane %v932, 4
      %v935 = vshll.u32 %v815, 16
      %v937 = vrot.slane %v935, 5
      %v938 = vsel %vm199, %v933, %v937
      %v940 = vshrl.u32 %v805, 16
      %v942 = vrot.slane %v940, 4
      %v943 = vshll.u32 %v805, 16
      %v945 = vrot.slane %v943, 5
      %v946 = vor.u32 %v942, %v945
      %v947 = vrot.slane %v946, 4
      %v949 = vshll.u32 %v806, 16
      %v951 = vrot.slane %v949, 5
      %v952 = vsel %vm199, %v947, %v951
      %v953 = vshrl.u32 %v806, 16
      %v955 = vrot.slane %v953, 4
      %v956 = vor.u32 %v955, %v951
      %v957 = vrot.slane %v956, 4
      %v959 = vshll.u32 %v816, 16
      %v961 = vrot.slane %v959, 5
      %v962 = vsel %vm199, %v957, %v961
      %v964 = vshrl.u32 %v807, 16
      %v966 = vrot.slane %v964, 4
      %v967 = vshll.u32 %v807, 16
      %v969 = vrot.slane %v967, 5
      %v970 = vor.u32 %v966, %v969
      %v971 = vrot.slane %v970, 4
      %v973 = vshll.u32 %v808, 16
      %v975 = vrot.slane %v973, 5
      %v976 = vsel %vm199, %v971, %v975
      %v977 = vshrl.u32 %v808, 16
      %v979 = vrot.slane %v977, 4
      %v980 = vor.u32 %v979, %v975
      %v981 = vrot.slane %v980, 4
      %v983 = vshll.u32 %v817, 16
      %v985 = vrot.slane %v983, 5
      %v986 = vsel %vm199, %v981, %v985
      %v988 = vshrl.u32 %v809, 16
      %v990 = vrot.slane %v988, 4
      %v991 = vshll.u32 %v809, 16
      %v993 = vrot.slane %v991, 5
      %v994 = vor.u32 %v990, %v993
      %v995 = vrot.slane %v994, 4
      %v997 = vshll.u32 %v810, 16
      %v999 = vrot.slane %v997, 5
      %v1000 = vsel %vm199, %v995, %v999
      %v1001 = vshrl.u32 %v810, 16
      %v1003 = vrot.slane %v1001, 4
      %v1004 = vor.u32 %v1003, %v999
      %v1005 = vrot.slane %v1004, 4
      %v1007 = vshll.u32 %v818, 16
      %v1009 = vrot.slane %v1007, 5
      %v1010 = vsel %vm199, %v1005, %v1009
      %v1011 = vld [vmem:[%s794] sm:$0xe]
      %v1012 = vld [vmem:[%s794 + $0xc] sm:$0xe]
      %v1013 = vld [vmem:[%s794 + $0x18] sm:$0xe]
      %v1014 = vld [vmem:[%s794 + $0x24] sm:$0xe]
      %v1015 = vld [vmem:[%s794 + $0x30] sm:$0xe]
      %v1016 = vld [vmem:[%s794 + $0x3c] sm:$0xe]
      %v1017 = vld [vmem:[%s794 + $0x48] sm:$0xe]
      %v1018 = vld [vmem:[%s794 + $0x54] sm:$0xe]
      %v1043 = vrot.slane %v1011, 5
      %v1044 = vrot.slane %v1043, 4
      %v1045 = vrot.slane %v796, 5
      %v1046 = vsel %vm426, %v1044, %v1045
      %v1047 = vrot.slane %v1045, 4
      %v1048 = vrot.slane %v811, 5
      %v1049 = vsel %vm426, %v1047, %v1048
      %v1050 = vrot.slane %v1012, 5
      %v1051 = vrot.slane %v1050, 4
      %v1052 = vrot.slane %v798, 5
      %v1053 = vsel %vm426, %v1051, %v1052
      %v1054 = vrot.slane %v1052, 4
      %v1055 = vrot.slane %v812, 5
      %v1056 = vsel %vm426, %v1054, %v1055
      %v1057 = vrot.slane %v1013, 5
      %v1058 = vrot.slane %v1057, 4
      %v1059 = vrot.slane %v800, 5
      %v1060 = vsel %vm426, %v1058, %v1059
      %v1061 = vrot.slane %v1059, 4
      %v1062 = vrot.slane %v813, 5
      %v1063 = vsel %vm426, %v1061, %v1062
      %v1064 = vrot.slane %v1014, 5
      %v1065 = vrot.slane %v1064, 4
      %v1066 = vrot.slane %v802, 5
      %v1067 = vsel %vm426, %v1065, %v1066
      %v1068 = vrot.slane %v1066, 4
      %v1069 = vrot.slane %v814, 5
      %v1070 = vsel %vm426, %v1068, %v1069
      %v1071 = vrot.slane %v1015, 5
      %v1072 = vrot.slane %v1071, 4
      %v1073 = vrot.slane %v804, 5
      %v1074 = vsel %vm426, %v1072, %v1073
      %v1075 = vrot.slane %v1073, 4
      %v1076 = vrot.slane %v815, 5
      %v1077 = vsel %vm426, %v1075, %v1076
      %v1078 = vrot.slane %v1016, 5
      %v1079 = vrot.slane %v1078, 4
      %v1080 = vrot.slane %v806, 5
      %v1081 = vsel %vm426, %v1079, %v1080
      %v1082 = vrot.slane %v1080, 4
      %v1083 = vrot.slane %v816, 5
      %v1084 = vsel %vm426, %v1082, %v1083
      %v1085 = vrot.slane %v1017, 5
      %v1086 = vrot.slane %v1085, 4
      %v1087 = vrot.slane %v808, 5
      %v1088 = vsel %vm426, %v1086, %v1087
      %v1089 = vrot.slane %v1087, 4
      %v1090 = vrot.slane %v817, 5
      %v1091 = vsel %vm426, %v1089, %v1090
      %v1092 = vrot.slane %v1018, 5
      %v1093 = vrot.slane %v1092, 4
      %v1094 = vrot.slane %v810, 5
      %v1095 = vsel %vm426, %v1093, %v1094
      %v1096 = vrot.slane %v1094, 4
      %v1097 = vrot.slane %v818, 5
      %v1098 = vsel %vm426, %v1096, %v1097
      %v1107 = vunpack.c.l.b16 %v173
      %v1108 = vunpack.c.l.b16 %v174
      %v1109 = vunpack.c.l.b16 %v175
      %v1110 = vunpack.c.l.b16 %v176
      %v1111 = vunpack.c.l.b16 %v177
      %v1112 = vunpack.c.l.b16 %v178
      %v1113 = vunpack.c.l.b16 %v179
      %v1114 = vunpack.c.l.b16 %v180
      %v1115 = vunpack.c.l.b16 %v181
      %v1116 = vunpack.c.l.b16 %v182
      %v1117 = vunpack.c.l.b16 %v183
      %v1118 = vunpack.c.l.b16 %v184
      %v1119 = vunpack.c.l.b16 %v185
      %v1120 = vunpack.c.l.b16 %v186
      %v1121 = vunpack.c.l.b16 %v187
      %v1122 = vunpack.c.l.b16 %v188
      %v1123 = vpack.c.b16 %v1108, %v1107
      %v1124 = vpack.c.b16 %v1110, %v1109
      %v1125 = vpack.c.b16 %v1112, %v1111
      %v1126 = vpack.c.b16 %v1114, %v1113
      %v1127 = vpack.c.b16 %v1116, %v1115
      %v1128 = vpack.c.b16 %v1118, %v1117
      %v1129 = vpack.c.b16 %v1120, %v1119
      %v1130 = vpack.c.b16 %v1122, %v1121
      %v1131 = vunpack.c.l.b16 %v213
      %v1132 = vunpack.c.l.b16 %v223
      %v1133 = vunpack.c.l.b16 %v237
      %v1134 = vunpack.c.l.b16 %v247
      %v1135 = vunpack.c.l.b16 %v261
      %v1136 = vunpack.c.l.b16 %v271
      %v1137 = vunpack.c.l.b16 %v285
      %v1138 = vunpack.c.l.b16 %v295
      %v1139 = vunpack.c.l.b16 %v309
      %v1140 = vunpack.c.l.b16 %v319
      %v1141 = vunpack.c.l.b16 %v333
      %v1142 = vunpack.c.l.b16 %v343
      %v1143 = vunpack.c.l.b16 %v357
      %v1144 = vunpack.c.l.b16 %v367
      %v1145 = vunpack.c.l.b16 %v381
      %v1146 = vunpack.c.l.b16 %v391
      %v1147 = vpack.c.b16 %v1132, %v1131
      %v1148 = vpack.c.b16 %v1134, %v1133
      %v1149 = vpack.c.b16 %v1136, %v1135
      %v1150 = vpack.c.b16 %v1138, %v1137
      %v1151 = vpack.c.b16 %v1140, %v1139
      %v1152 = vpack.c.b16 %v1142, %v1141
      %v1153 = vpack.c.b16 %v1144, %v1143
      %v1154 = vpack.c.b16 %v1146, %v1145
      %1155 = vrot.lane.b32.xlu0 %v1147, 16
      %v1156 = vpop.permute.xlu0 %1155
      %1157 = vrot.lane.b32.xlu0 %v1148, 16
      %v1158 = vpop.permute.xlu0 %1157
      %1159 = vrot.lane.b32.xlu0 %v1149, 16
      %v1160 = vpop.permute.xlu0 %1159
      %1161 = vrot.lane.b32.xlu0 %v1150, 16
      %v1162 = vpop.permute.xlu0 %1161
      %1163 = vrot.lane.b32.xlu0 %v1151, 16
      %v1164 = vpop.permute.xlu0 %1163
      %1165 = vrot.lane.b32.xlu0 %v1152, 16
      %v1166 = vpop.permute.xlu0 %1165
      %1167 = vrot.lane.b32.xlu0 %v1153, 16
      %v1168 = vpop.permute.xlu0 %1167
      %1169 = vrot.lane.b32.xlu0 %v1154, 16
      %v1170 = vpop.permute.xlu0 %1169
      %v1171 = vunpack.c.l.b16 %v430
      %v1172 = vunpack.c.l.b16 %v433
      %v1173 = vunpack.c.l.b16 %v437
      %v1174 = vunpack.c.l.b16 %v440
      %v1175 = vunpack.c.l.b16 %v444
      %v1176 = vunpack.c.l.b16 %v447
      %v1177 = vunpack.c.l.b16 %v451
      %v1178 = vunpack.c.l.b16 %v454
      %v1179 = vunpack.c.l.b16 %v458
      %v1180 = vunpack.c.l.b16 %v461
      %v1181 = vunpack.c.l.b16 %v465
      %v1182 = vunpack.c.l.b16 %v468
      %v1183 = vunpack.c.l.b16 %v472
      %v1184 = vunpack.c.l.b16 %v475
      %v1185 = vunpack.c.l.b16 %v479
      %v1186 = vunpack.c.l.b16 %v482
      %v1187 = vpack.c.b16 %v1172, %v1171
      %v1188 = vpack.c.b16 %v1174, %v1173
      %v1189 = vpack.c.b16 %v1176, %v1175
      %v1190 = vpack.c.b16 %v1178, %v1177
      %v1191 = vpack.c.b16 %v1180, %v1179
      %v1192 = vpack.c.b16 %v1182, %v1181
      %v1193 = vpack.c.b16 %v1184, %v1183
      %v1194 = vpack.c.b16 %v1186, %v1185
      %1195 = vrot.lane.b32.xlu0 %v1187, 32
      %v1196 = vpop.permute.xlu0 %1195
      %1197 = vrot.lane.b32.xlu0 %v1188, 32
      %v1198 = vpop.permute.xlu0 %1197
      %1199 = vrot.lane.b32.xlu0 %v1189, 32
      %v1200 = vpop.permute.xlu0 %1199
      %1201 = vrot.lane.b32.xlu0 %v1190, 32
      %v1202 = vpop.permute.xlu0 %1201
      %1203 = vrot.lane.b32.xlu0 %v1191, 32
      %v1204 = vpop.permute.xlu0 %1203
      %1205 = vrot.lane.b32.xlu0 %v1192, 32
      %v1206 = vpop.permute.xlu0 %1205
      %1207 = vrot.lane.b32.xlu0 %v1193, 32
      %v1208 = vpop.permute.xlu0 %1207
      %1209 = vrot.lane.b32.xlu0 %v1194, 32
      %v1210 = vpop.permute.xlu0 %1209
      %v1219 = vunpack.c.l.b16 %v487
      %v1220 = vunpack.c.l.b16 %v488
      %v1221 = vunpack.c.l.b16 %v489
      %v1222 = vunpack.c.l.b16 %v490
      %v1223 = vunpack.c.l.b16 %v491
      %v1224 = vunpack.c.l.b16 %v492
      %v1225 = vunpack.c.l.b16 %v493
      %v1226 = vunpack.c.l.b16 %v494
      %v1227 = vunpack.c.l.b16 %v495
      %v1228 = vunpack.c.l.b16 %v496
      %v1229 = vunpack.c.l.b16 %v497
      %v1230 = vunpack.c.l.b16 %v498
      %v1231 = vunpack.c.l.b16 %v499
      %v1232 = vunpack.c.l.b16 %v500
      %v1233 = vunpack.c.l.b16 %v501
      %v1234 = vunpack.c.l.b16 %v502
      %v1235 = vpack.c.b16 %v1220, %v1219
      %v1236 = vpack.c.b16 %v1222, %v1221
      %v1237 = vpack.c.b16 %v1224, %v1223
      %v1238 = vpack.c.b16 %v1226, %v1225
      %v1239 = vpack.c.b16 %v1228, %v1227
      %v1240 = vpack.c.b16 %v1230, %v1229
      %v1241 = vpack.c.b16 %v1232, %v1231
      %v1242 = vpack.c.b16 %v1234, %v1233
      %1243 = vrot.lane.b32.xlu0 %v1235, 48
      %v1244 = vpop.permute.xlu0 %1243
      %1245 = vrot.lane.b32.xlu0 %v1236, 48
      %v1246 = vpop.permute.xlu0 %1245
      %1247 = vrot.lane.b32.xlu0 %v1237, 48
      %v1248 = vpop.permute.xlu0 %1247
      %1249 = vrot.lane.b32.xlu0 %v1238, 48
      %v1250 = vpop.permute.xlu0 %1249
      %1251 = vrot.lane.b32.xlu0 %v1239, 48
      %v1252 = vpop.permute.xlu0 %1251
      %1253 = vrot.lane.b32.xlu0 %v1240, 48
      %v1254 = vpop.permute.xlu0 %1253
      %1255 = vrot.lane.b32.xlu0 %v1241, 48
      %v1256 = vpop.permute.xlu0 %1255
      %1257 = vrot.lane.b32.xlu0 %v1242, 48
      %v1258 = vpop.permute.xlu0 %1257
      %v1259 = vunpack.c.l.b16 %v524
      %v1260 = vunpack.c.l.b16 %v534
      %v1261 = vunpack.c.l.b16 %v548
      %v1262 = vunpack.c.l.b16 %v558
      %v1263 = vunpack.c.l.b16 %v572
      %v1264 = vunpack.c.l.b16 %v582
      %v1265 = vunpack.c.l.b16 %v596
      %v1266 = vunpack.c.l.b16 %v606
      %v1267 = vunpack.c.l.b16 %v620
      %v1268 = vunpack.c.l.b16 %v630
      %v1269 = vunpack.c.l.b16 %v644
      %v1270 = vunpack.c.l.b16 %v654
      %v1271 = vunpack.c.l.b16 %v668
      %v1272 = vunpack.c.l.b16 %v678
      %v1273 = vunpack.c.l.b16 %v692
      %v1274 = vunpack.c.l.b16 %v702
      %v1275 = vpack.c.b16 %v1260, %v1259
      %v1276 = vpack.c.b16 %v1262, %v1261
      %v1277 = vpack.c.b16 %v1264, %v1263
      %v1278 = vpack.c.b16 %v1266, %v1265
      %v1279 = vpack.c.b16 %v1268, %v1267
      %v1280 = vpack.c.b16 %v1270, %v1269
      %v1281 = vpack.c.b16 %v1272, %v1271
      %v1282 = vpack.c.b16 %v1274, %v1273
      %1283 = vrot.lane.b32.xlu0 %v1275, 64
      %v1284 = vpop.permute.xlu0 %1283
      %1285 = vrot.lane.b32.xlu0 %v1276, 64
      %v1286 = vpop.permute.xlu0 %1285
      %1287 = vrot.lane.b32.xlu0 %v1277, 64
      %v1288 = vpop.permute.xlu0 %1287
      %1289 = vrot.lane.b32.xlu0 %v1278, 64
      %v1290 = vpop.permute.xlu0 %1289
      %1291 = vrot.lane.b32.xlu0 %v1279, 64
      %v1292 = vpop.permute.xlu0 %1291
      %1293 = vrot.lane.b32.xlu0 %v1280, 64
      %v1294 = vpop.permute.xlu0 %1293
      %1295 = vrot.lane.b32.xlu0 %v1281, 64
      %v1296 = vpop.permute.xlu0 %1295
      %1297 = vrot.lane.b32.xlu0 %v1282, 64
      %v1298 = vpop.permute.xlu0 %1297
      %v1299 = vunpack.c.l.b16 %v738
      %v1300 = vunpack.c.l.b16 %v741
      %v1301 = vunpack.c.l.b16 %v745
      %v1302 = vunpack.c.l.b16 %v748
      %v1303 = vunpack.c.l.b16 %v752
      %v1304 = vunpack.c.l.b16 %v755
      %v1305 = vunpack.c.l.b16 %v759
      %v1306 = vunpack.c.l.b16 %v762
      %v1307 = vunpack.c.l.b16 %v766
      %v1308 = vunpack.c.l.b16 %v769
      %v1309 = vunpack.c.l.b16 %v773
      %v1310 = vunpack.c.l.b16 %v776
      %v1311 = vunpack.c.l.b16 %v780
      %v1312 = vunpack.c.l.b16 %v783
      %v1313 = vunpack.c.l.b16 %v787
      %v1314 = vunpack.c.l.b16 %v790
      %v1315 = vpack.c.b16 %v1300, %v1299
      %v1316 = vpack.c.b16 %v1302, %v1301
      %v1317 = vpack.c.b16 %v1304, %v1303
      %v1318 = vpack.c.b16 %v1306, %v1305
      %v1319 = vpack.c.b16 %v1308, %v1307
      %v1320 = vpack.c.b16 %v1310, %v1309
      %v1321 = vpack.c.b16 %v1312, %v1311
      %v1322 = vpack.c.b16 %v1314, %v1313
      %1323 = vrot.lane.b32.xlu0 %v1315, 80
      %v1324 = vpop.permute.xlu0 %1323
      %1325 = vrot.lane.b32.xlu0 %v1316, 80
      %v1326 = vpop.permute.xlu0 %1325
      %1327 = vrot.lane.b32.xlu0 %v1317, 80
      %v1328 = vpop.permute.xlu0 %1327
      %1329 = vrot.lane.b32.xlu0 %v1318, 80
      %v1330 = vpop.permute.xlu0 %1329
      %1331 = vrot.lane.b32.xlu0 %v1319, 80
      %v1332 = vpop.permute.xlu0 %1331
      %1333 = vrot.lane.b32.xlu0 %v1320, 80
      %v1334 = vpop.permute.xlu0 %1333
      %1335 = vrot.lane.b32.xlu0 %v1321, 80
      %v1336 = vpop.permute.xlu0 %1335
      %1337 = vrot.lane.b32.xlu0 %v1322, 80
      %v1338 = vpop.permute.xlu0 %1337
      %v1347 = vunpack.c.l.b16 %v795
      %v1348 = vunpack.c.l.b16 %v796
      %v1349 = vunpack.c.l.b16 %v797
      %v1350 = vunpack.c.l.b16 %v798
      %v1351 = vunpack.c.l.b16 %v799
      %v1352 = vunpack.c.l.b16 %v800
      %v1353 = vunpack.c.l.b16 %v801
      %v1354 = vunpack.c.l.b16 %v802
      %v1355 = vunpack.c.l.b16 %v803
      %v1356 = vunpack.c.l.b16 %v804
      %v1357 = vunpack.c.l.b16 %v805
      %v1358 = vunpack.c.l.b16 %v806
      %v1359 = vunpack.c.l.b16 %v807
      %v1360 = vunpack.c.l.b16 %v808
      %v1361 = vunpack.c.l.b16 %v809
      %v1362 = vunpack.c.l.b16 %v810
      %v1363 = vpack.c.b16 %v1348, %v1347
      %v1364 = vpack.c.b16 %v1350, %v1349
      %v1365 = vpack.c.b16 %v1352, %v1351
      %v1366 = vpack.c.b16 %v1354, %v1353
      %v1367 = vpack.c.b16 %v1356, %v1355
      %v1368 = vpack.c.b16 %v1358, %v1357
      %v1369 = vpack.c.b16 %v1360, %v1359
      %v1370 = vpack.c.b16 %v1362, %v1361
      %1371 = vrot.lane.b32.xlu0 %v1363, 96
      %v1372 = vpop.permute.xlu0 %1371
      %1373 = vrot.lane.b32.xlu0 %v1364, 96
      %v1374 = vpop.permute.xlu0 %1373
      %1375 = vrot.lane.b32.xlu0 %v1365, 96
      %v1376 = vpop.permute.xlu0 %1375
      %1377 = vrot.lane.b32.xlu0 %v1366, 96
      %v1378 = vpop.permute.xlu0 %1377
      %1379 = vrot.lane.b32.xlu0 %v1367, 96
      %v1380 = vpop.permute.xlu0 %1379
      %1381 = vrot.lane.b32.xlu0 %v1368, 96
      %v1382 = vpop.permute.xlu0 %1381
      %1383 = vrot.lane.b32.xlu0 %v1369, 96
      %v1384 = vpop.permute.xlu0 %1383
      %1385 = vrot.lane.b32.xlu0 %v1370, 96
      %v1386 = vpop.permute.xlu0 %1385
      %v1387 = vunpack.c.l.b16 %v832
      %v1388 = vunpack.c.l.b16 %v842
      %v1389 = vunpack.c.l.b16 %v856
      %v1390 = vunpack.c.l.b16 %v866
      %v1391 = vunpack.c.l.b16 %v880
      %v1392 = vunpack.c.l.b16 %v890
      %v1393 = vunpack.c.l.b16 %v904
      %v1394 = vunpack.c.l.b16 %v914
      %v1395 = vunpack.c.l.b16 %v928
      %v1396 = vunpack.c.l.b16 %v938
      %v1397 = vunpack.c.l.b16 %v952
      %v1398 = vunpack.c.l.b16 %v962
      %v1399 = vunpack.c.l.b16 %v976
      %v1400 = vunpack.c.l.b16 %v986
      %v1401 = vunpack.c.l.b16 %v1000
      %v1402 = vunpack.c.l.b16 %v1010
      %v1403 = vpack.c.b16 %v1388, %v1387
      %v1404 = vpack.c.b16 %v1390, %v1389
      %v1405 = vpack.c.b16 %v1392, %v1391
      %v1406 = vpack.c.b16 %v1394, %v1393
      %v1407 = vpack.c.b16 %v1396, %v1395
      %v1408 = vpack.c.b16 %v1398, %v1397
      %v1409 = vpack.c.b16 %v1400, %v1399
      %v1410 = vpack.c.b16 %v1402, %v1401
      %1411 = vrot.lane.b32.xlu0 %v1403, 112
      %v1412 = vpop.permute.xlu0 %1411
      %1413 = vrot.lane.b32.xlu0 %v1404, 112
      %v1414 = vpop.permute.xlu0 %1413
      %1415 = vrot.lane.b32.xlu0 %v1405, 112
      %v1416 = vpop.permute.xlu0 %1415
      %1417 = vrot.lane.b32.xlu0 %v1406, 112
      %v1418 = vpop.permute.xlu0 %1417
      %1419 = vrot.lane.b32.xlu0 %v1407, 112
      %v1420 = vpop.permute.xlu0 %1419
      %1421 = vrot.lane.b32.xlu0 %v1408, 112
      %v1422 = vpop.permute.xlu0 %1421
      %1423 = vrot.lane.b32.xlu0 %v1409, 112
      %v1424 = vpop.permute.xlu0 %1423
      %1425 = vrot.lane.b32.xlu0 %v1410, 112
      %v1426 = vpop.permute.xlu0 %1425
      %v1427 = vunpack.c.l.b16 %v1046
      %v1428 = vunpack.c.l.b16 %v1049
      %v1429 = vunpack.c.l.b16 %v1053
      %v1430 = vunpack.c.l.b16 %v1056
      %v1431 = vunpack.c.l.b16 %v1060
      %v1432 = vunpack.c.l.b16 %v1063
      %v1433 = vunpack.c.l.b16 %v1067
      %v1434 = vunpack.c.l.b16 %v1070
      %v1435 = vunpack.c.l.b16 %v1074
      %v1436 = vunpack.c.l.b16 %v1077
      %v1437 = vunpack.c.l.b16 %v1081
      %v1438 = vunpack.c.l.b16 %v1084
      %v1439 = vunpack.c.l.b16 %v1088
      %v1440 = vunpack.c.l.b16 %v1091
      %v1441 = vunpack.c.l.b16 %v1095
      %v1442 = vunpack.c.l.b16 %v1098
      %v1443 = vpack.c.b16 %v1428, %v1427
      %v1444 = vpack.c.b16 %v1430, %v1429
      %v1445 = vpack.c.b16 %v1432, %v1431
      %v1446 = vpack.c.b16 %v1434, %v1433
      %v1447 = vpack.c.b16 %v1436, %v1435
      %v1448 = vpack.c.b16 %v1438, %v1437
      %v1449 = vpack.c.b16 %v1440, %v1439
      %v1450 = vpack.c.b16 %v1442, %v1441
      %vm1451 = vcmask 130048
      %v1454 = vsel %vm1451, %v1123, %v1156
      %v1457 = vsel %vm1451, %v1124, %v1158
      %v1460 = vsel %vm1451, %v1125, %v1160
      %v1463 = vsel %vm1451, %v1126, %v1162
      %v1466 = vsel %vm1451, %v1127, %v1164
      %v1469 = vsel %vm1451, %v1128, %v1166
      %v1472 = vsel %vm1451, %v1129, %v1168
      %v1475 = vsel %vm1451, %v1130, %v1170
      %vm1476 = vcmask 261120
      %v1478 = vsel %vm1476, %v1454, %v1196
      %v1480 = vsel %vm1476, %v1457, %v1198
      %v1482 = vsel %vm1476, %v1460, %v1200
      %v1484 = vsel %vm1476, %v1463, %v1202
      %v1486 = vsel %vm1476, %v1466, %v1204
      %v1488 = vsel %vm1476, %v1469, %v1206
      %v1490 = vsel %vm1476, %v1472, %v1208
      %v1492 = vsel %vm1476, %v1475, %v1210
      %vm1493 = vcmask 392192
      %v1495 = vsel %vm1493, %v1478, %v1244
      %v1497 = vsel %vm1493, %v1480, %v1246
      %v1499 = vsel %vm1493, %v1482, %v1248
      %v1501 = vsel %vm1493, %v1484, %v1250
      %v1503 = vsel %vm1493, %v1486, %v1252
      %v1505 = vsel %vm1493, %v1488, %v1254
      %v1507 = vsel %vm1493, %v1490, %v1256
      %v1509 = vsel %vm1493, %v1492, %v1258
      %vm1510 = vcmask 523264
      %v1512 = vsel %vm1510, %v1495, %v1284
      %v1514 = vsel %vm1510, %v1497, %v1286
      %v1516 = vsel %vm1510, %v1499, %v1288
      %v1518 = vsel %vm1510, %v1501, %v1290
      %v1520 = vsel %vm1510, %v1503, %v1292
      %v1522 = vsel %vm1510, %v1505, %v1294
      %v1524 = vsel %vm1510, %v1507, %v1296
      %v1526 = vsel %vm1510, %v1509, %v1298
      %vm1527 = vcmask 654336
      %v1529 = vsel %vm1527, %v1512, %v1324
      %v1531 = vsel %vm1527, %v1514, %v1326
      %v1533 = vsel %vm1527, %v1516, %v1328
      %v1535 = vsel %vm1527, %v1518, %v1330
      %v1537 = vsel %vm1527, %v1520, %v1332
      %v1539 = vsel %vm1527, %v1522, %v1334
      %v1541 = vsel %vm1527, %v1524, %v1336
      %v1543 = vsel %vm1527, %v1526, %v1338
      %vm1544 = vcmask 785408
      %v1546 = vsel %vm1544, %v1529, %v1372
      %v1548 = vsel %vm1544, %v1531, %v1374
      %v1550 = vsel %vm1544, %v1533, %v1376
      %v1552 = vsel %vm1544, %v1535, %v1378
      %v1554 = vsel %vm1544, %v1537, %v1380
      %v1556 = vsel %vm1544, %v1539, %v1382
      %v1558 = vsel %vm1544, %v1541, %v1384
      %v1560 = vsel %vm1544, %v1543, %v1386
      %vm1561 = vcmask 916480
      %v1563 = vsel %vm1561, %v1546, %v1412
      %v1566 = vsel %vm1561, %v1548, %v1414
      %v1569 = vsel %vm1561, %v1550, %v1416
      %v1572 = vsel %vm1561, %v1552, %v1418
      %v1575 = vsel %vm1561, %v1554, %v1420
      %v1578 = vsel %vm1561, %v1556, %v1422
      %v1581 = vsel %vm1561, %v1558, %v1424
      %v1584 = vsel %vm1561, %v1560, %v1426
      %v1586 = vld [vmem:[%s1] sm:$0xf]
      %v1587 = vld [vmem:[%s1 + $0x4] sm:$0xf]
      %v1588 = vld [vmem:[%s1 + $0x8] sm:$0xf]
      %v1589 = vld [vmem:[%s1 + $0xc] sm:$0xf]
      %v1590 = vld [vmem:[%s1 + $0x10] sm:$0xf]
      %v1591 = vld [vmem:[%s1 + $0x14] sm:$0xf]
      %v1592 = vld [vmem:[%s1 + $0x18] sm:$0xf]
      %v1593 = vld [vmem:[%s1 + $0x1c] sm:$0xf]
      %v1594 = vld [vmem:[%s1 + $0x20] sm:$0xf]
      %v1595 = vld [vmem:[%s1 + $0x24] sm:$0xf]
      %v1596 = vld [vmem:[%s1 + $0x28] sm:$0xf]
      %v1597 = vld [vmem:[%s1 + $0x2c] sm:$0xf]
      %v1598 = vld [vmem:[%s1 + $0x30] sm:$0xf]
      %v1599 = vld [vmem:[%s1 + $0x34] sm:$0xf]
      %v1600 = vld [vmem:[%s1 + $0x38] sm:$0xf]
      %v1601 = vld [vmem:[%s1 + $0x3c] sm:$0xf]
      %v1602 = vld [vmem:[%s1 + $0x40] sm:$0xf]
      %v1603 = vld [vmem:[%s1 + $0x44] sm:$0xf]
      %v1622 = vunpack.c.l.b16 %v1586
      %v1623 = vunpack.c.l.b16 %v1587
      %v1624 = vunpack.c.l.b16 %v1588
      %v1625 = vunpack.c.l.b16 %v1589
      %v1626 = vunpack.c.l.b16 %v1590
      %v1627 = vunpack.c.l.b16 %v1591
      %v1628 = vunpack.c.l.b16 %v1592
      %v1629 = vunpack.c.l.b16 %v1593
      %v1630 = vunpack.c.l.b16 %v1594
      %v1631 = vunpack.c.l.b16 %v1595
      %v1632 = vunpack.c.l.b16 %v1596
      %v1633 = vunpack.c.l.b16 %v1597
      %v1634 = vunpack.c.l.b16 %v1598
      %v1635 = vunpack.c.l.b16 %v1599
      %v1636 = vunpack.c.l.b16 %v1600
      %v1637 = vunpack.c.l.b16 %v1601
      %v1638 = vunpack.c.l.b16 %v1602
      %v1639 = vunpack.c.l.b16 %v1603
      %v1640 = vpack.c.b16 %v1623, %v1622
      %v1641 = vpack.c.b16 %v1625, %v1624
      %v1642 = vpack.c.b16 %v1627, %v1626
      %v1643 = vpack.c.b16 %v1629, %v1628
      %v1644 = vpack.c.b16 %v1631, %v1630
      %v1645 = vpack.c.b16 %v1633, %v1632
      %v1646 = vpack.c.b16 %v1635, %v1634
      %v1647 = vpack.c.b16 %v1637, %v1636
      %v1648 = vpack.c.b16 %v1639, %v1638
      %v1659 = vsel %vm1451, %v1443, 0
      %v1662 = vsel %vm1451, %v1444, 0
      %v1665 = vsel %vm1451, %v1445, 0
      %v1668 = vsel %vm1451, %v1446, 0
      %v1671 = vsel %vm1451, %v1447, 0
      %v1674 = vsel %vm1451, %v1448, 0
      %v1677 = vsel %vm1451, %v1449, 0
      %v1680 = vsel %vm1451, %v1450, 0
      %1682 = vmatprep.subr.bf16.mxu0 0
      %1683 = vmatpush1.bf16.msra.mxu0 %v1640
      %1684 = vmatprep.subr.bf16.mxu0 0
      %1685 = vmatpush1.bf16.msra.mxu0 %v1641
      %1686 = vmatprep.subr.bf16.mxu0 0
      %1687 = vmatpush1.bf16.msra.mxu0 %v1642
      %1688 = vmatprep.subr.bf16.mxu0 0
      %1689 = vmatpush1.bf16.msra.mxu0 %v1643
      %1690 = vmatprep.subr.bf16.mxu0 0
      %1691 = vmatpush1.bf16.msra.mxu0 %v1644
      %1692 = vmatprep.subr.bf16.mxu0 0
      %1693 = vmatpush1.bf16.msra.mxu0 %v1645
      %1694 = vmatprep.subr.bf16.mxu0 0
      %1695 = vmatpush1.bf16.msra.mxu0 %v1646
      %1696 = vmatprep.subr.bf16.mxu0 0
      %1697 = vmatpush1.bf16.msra.mxu0 %v1647
      %1698 = vmatprep.subr.bf16.mxu0 0
      %1699 = vmatpush1.bf16.msra.mxu0 %v1648
      %1700 = vmatprep.subr.bf16.mxu0 0
      %1701 = vmatpush1.bf16.msra.mxu0 0
      %1702 = vmatprep.subr.bf16.mxu0 0
      %1703 = vmatpush1.bf16.msra.mxu0 0
      %1704 = vmatprep.subr.bf16.mxu0 0
      %1705 = vmatpush1.bf16.msra.mxu0 0
      %1706 = vmatprep.subr.bf16.mxu0 0
      %1707 = vmatpush1.bf16.msra.mxu0 0
      %1708 = vmatprep.subr.bf16.mxu0 0
      %1709 = vmatpush1.bf16.msra.mxu0 0
      %1710 = vmatprep.subr.bf16.mxu0 0
      %1711 = vmatpush1.bf16.msra.mxu0 0
      %1712 = vmatprep.subr.bf16.mxu0 0
      %1713 = vmatpush1.bf16.msra.mxu0 0
      %1714 = vmatprep.mubr.bf16.mxu0 %v1659
      %1715 = vmatmul.mubr.bf16.gmra.mrb[0].mxu0 %v1563
      %v1716 = vpop.f32.mrb[0].mxu0
      %v1717 = vadd.f32 0.0, %v1716
      %v1718 = vpop.f32.mrb[0].mxu0
      %v1719 = vpop.f32.mrb[0].mxu0
      %v1720 = vadd.f32 0.0, %v1719
      %v1721 = vpop.f32.mrb[0].mxu0
      %1722 = vmatprep.mubr.bf16.mxu0 %v1662
      %1723 = vmatmul.mubr.bf16.gmra.mrb[0].mxu0 %v1566
      %v1724 = vpop.f32.mrb[0].mxu0
      %v1725 = vadd.f32 0.0, %v1724
      %v1726 = vpop.f32.mrb[0].mxu0
      %v1727 = vpop.f32.mrb[0].mxu0
      %v1728 = vadd.f32 0.0, %v1727
      %v1729 = vpop.f32.mrb[0].mxu0
      %1730 = vmatprep.mubr.bf16.mxu0 %v1665
      %1731 = vmatmul.mubr.bf16.gmra.mrb[0].mxu0 %v1569
      %v1732 = vpop.f32.mrb[0].mxu0
      %v1733 = vadd.f32 0.0, %v1732
      %v1734 = vpop.f32.mrb[0].mxu0
      %v1735 = vpop.f32.mrb[0].mxu0
      %v1736 = vadd.f32 0.0, %v1735
      %v1737 = vpop.f32.mrb[0].mxu0
      %1738 = vmatprep.mubr.bf16.mxu0 %v1668
      %1739 = vmatmul.mubr.bf16.gmra.mrb[0].mxu0 %v1572
      %v1740 = vpop.f32.mrb[0].mxu0
      %v1741 = vadd.f32 0.0, %v1740
      %v1742 = vpop.f32.mrb[0].mxu0
      %v1743 = vpop.f32.mrb[0].mxu0
      %v1744 = vadd.f32 0.0, %v1743
      %v1745 = vpop.f32.mrb[0].mxu0
      %1746 = vmatprep.mubr.bf16.mxu0 %v1671
      %1747 = vmatmul.mubr.bf16.gmra.mrb[0].mxu0 %v1575
      %v1748 = vpop.f32.mrb[0].mxu0
      %v1749 = vadd.f32 0.0, %v1748
      %v1750 = vpop.f32.mrb[0].mxu0
      %v1751 = vpop.f32.mrb[0].mxu0
      %v1752 = vadd.f32 0.0, %v1751
      %v1753 = vpop.f32.mrb[0].mxu0
      %1754 = vmatprep.mubr.bf16.mxu0 %v1674
      %1755 = vmatmul.mubr.bf16.gmra.mrb[0].mxu0 %v1578
      %v1756 = vpop.f32.mrb[0].mxu0
      %v1757 = vadd.f32 0.0, %v1756
      %v1758 = vpop.f32.mrb[0].mxu0
      %v1759 = vpop.f32.mrb[0].mxu0
      %v1760 = vadd.f32 0.0, %v1759
      %v1761 = vpop.f32.mrb[0].mxu0
      %1762 = vmatprep.mubr.bf16.mxu0 %v1677
      %1763 = vmatmul.mubr.bf16.gmra.mrb[0].mxu0 %v1581
      %v1764 = vpop.f32.mrb[0].mxu0
      %v1765 = vadd.f32 0.0, %v1764
      %v1766 = vpop.f32.mrb[0].mxu0
      %v1767 = vpop.f32.mrb[0].mxu0
      %v1768 = vadd.f32 0.0, %v1767
      %v1769 = vpop.f32.mrb[0].mxu0
      %1770 = vmatprep.mubr.bf16.mxu0 %v1680
      %1771 = vmatmul.mubr.bf16.gmra.mrb[0].mxu0 %v1584
      %v1772 = vpop.f32.mrb[0].mxu0
      %v1773 = vadd.f32 0.0, %v1772
      %v1774 = vpop.f32.mrb[0].mxu0
      %v1775 = vpop.f32.mrb[0].mxu0
      %v1776 = vadd.f32 0.0, %v1775
      %v1777 = vpop.f32.mrb[0].mxu0
      %1778 = vdwg.mxu0
      %v1779 = vadd.f32 %v1717, %v1720
      %v1780 = vadd.f32 %v1779, %v1725
      %v1781 = vadd.f32 %v1780, %v1728
      %v1782 = vadd.f32 %v1781, %v1733
      %v1783 = vadd.f32 %v1782, %v1736
      %v1784 = vadd.f32 %v1783, %v1741
      %v1785 = vadd.f32 %v1784, %v1744
      %v1786 = vadd.f32 %v1785, %v1749
      %v1787 = vadd.f32 %v1786, %v1752
      %v1788 = vadd.f32 %v1787, %v1757
      %v1789 = vadd.f32 %v1788, %v1760
      %v1790 = vadd.f32 %v1789, %v1765
      %v1791 = vadd.f32 %v1790, %v1768
      %v1792 = vadd.f32 %v1791, %v1773
      %v1793 = vadd.f32 %v1792, %v1776
      %v1794 = vrot.slane %v1793, 4
      %v1795 = vadd.f32 %v1793, %v1794
      %v1796 = vrot.slane %v1795, 2
      %v1797 = vadd.f32 %v1795, %v1796
      %v1798 = vrot.slane %v1797, 1
      %v1799 = vadd.f32 %v1797, %v1798
      %v1800 = vmul.f32 %v1717, %v1717
      %v1801 = vmul.f32 %v1720, %v1720
      %v1802 = vmul.f32 %v1725, %v1725
      %v1803 = vmul.f32 %v1728, %v1728
      %v1804 = vmul.f32 %v1733, %v1733
      %v1805 = vmul.f32 %v1736, %v1736
      %v1806 = vmul.f32 %v1741, %v1741
      %v1807 = vmul.f32 %v1744, %v1744
      %v1808 = vmul.f32 %v1749, %v1749
      %v1809 = vmul.f32 %v1752, %v1752
      %v1810 = vmul.f32 %v1757, %v1757
      %v1811 = vmul.f32 %v1760, %v1760
      %v1812 = vmul.f32 %v1765, %v1765
      %v1813 = vmul.f32 %v1768, %v1768
      %v1814 = vmul.f32 %v1773, %v1773
      %v1815 = vmul.f32 %v1776, %v1776
      %v1816 = vadd.f32 %v1800, %v1801
      %v1817 = vadd.f32 %v1816, %v1802
      %v1818 = vadd.f32 %v1817, %v1803
      %v1819 = vadd.f32 %v1818, %v1804
      %v1820 = vadd.f32 %v1819, %v1805
      %v1821 = vadd.f32 %v1820, %v1806
      %v1822 = vadd.f32 %v1821, %v1807
      %v1823 = vadd.f32 %v1822, %v1808
      %v1824 = vadd.f32 %v1823, %v1809
      %v1825 = vadd.f32 %v1824, %v1810
      %v1826 = vadd.f32 %v1825, %v1811
      %v1827 = vadd.f32 %v1826, %v1812
      %v1828 = vadd.f32 %v1827, %v1813
      %v1829 = vadd.f32 %v1828, %v1814
      %v1830 = vadd.f32 %v1829, %v1815
      %v1831 = vrot.slane %v1830, 4
      %v1832 = vadd.f32 %v1830, %v1831
      %v1833 = vrot.slane %v1832, 2
      %v1834 = vadd.f32 %v1832, %v1833
      %v1835 = vrot.slane %v1834, 1
      %v1836 = vadd.f32 %v1834, %v1835
      %vm1837 = vcmask 1040384
      %v1838 = vsel %vm1837, %v1799, %v1836
      %p1839 = scmp.eq.s32.totalorder %s18, 0
      %p1840 = scmp.eq.s32.totalorder %s19, 0
      %p1841 = pnand %p1839, %p1840
      %p1842 = pneg %p1841
      // Predicated region
      $region33: #{tpu_custom_call.1} parent=31 // pred_check
        _
      $region34: #{tpu_custom_call.1} parent=31 // pred_check_branch
        %1844 = sbr.rel (%p1841) target = $region36
      $region35: #{tpu_custom_call.1} parent=31 // pred_region
        %1845 = vst [vmem:[#allocation3] sm:$0x3] 0.0
      $region36: #{tpu_custom_call.1} parent=31 // pred_fallthru
        _
      %v1846 = vld [vmem:[#allocation3] sm:$0x3]
      %v1847 = vadd.f32 %v1846, %v1838
      %1848 = vst [vmem:[#allocation3] sm:$0x3] %v1847
      %s1849 = smul.u32 %s18, 2
      %s1850 = sadd.s32 %s1849, %s19
      %s1851 = smul.u32 %s1850, 128
      %s1852 = scalar_lea.vmem [#allocation2], %s1851
      %1853 = vst [vmem:[%s1852] sm:$0xff] %v1717
      %1854 = vst [vmem:[%s1852 + $0x8] sm:$0xff] %v1720
      %1855 = vst [vmem:[%s1852 + $0x10] sm:$0xff] %v1725
      %1856 = vst [vmem:[%s1852 + $0x18] sm:$0xff] %v1728
      %1857 = vst [vmem:[%s1852 + $0x20] sm:$0xff] %v1733
      %1858 = vst [vmem:[%s1852 + $0x28] sm:$0xff] %v1736
      %1859 = vst [vmem:[%s1852 + $0x30] sm:$0xff] %v1741
      %1860 = vst [vmem:[%s1852 + $0x38] sm:$0xff] %v1744
      %1861 = vst [vmem:[%s1852 + $0x40] sm:$0xff] %v1749
      %1862 = vst [vmem:[%s1852 + $0x48] sm:$0xff] %v1752
      %1863 = vst [vmem:[%s1852 + $0x50] sm:$0xff] %v1757
      %1864 = vst [vmem:[%s1852 + $0x58] sm:$0xff] %v1760
      %1865 = vst [vmem:[%s1852 + $0x60] sm:$0xff] %v1765
      %1866 = vst [vmem:[%s1852 + $0x68] sm:$0xff] %v1768
      %1867 = vst [vmem:[%s1852 + $0x70] sm:$0xff] %v1773
      %1868 = vst [vmem:[%s1852 + $0x78] sm:$0xff] %v1776
      %p1869 = scmp.eq.s32.totalorder %s18, 1
      %p1870 = scmp.eq.s32.totalorder %s19, 1
      %p1871 = pnand %p1869, %p1870
      %p1872 = pneg %p1871
      // Predicated region
      $region37: #{tpu_custom_call.1} parent=31 // pred_check
        _
      $region38: #{tpu_custom_call.1} parent=31 // pred_check_branch
        %1874 = sbr.rel (%p1871) target = $region40
      $region39: #{tpu_custom_call.1} parent=31 // pred_region
        %v1875 = vld [vmem:[#allocation3] sm:$0x3]
        %v1876 = vld [vmem:[%s2] sm:$0x3]
        %v1877 = vmul.f32 %v1875, 0.001953125
        %v1878 = vmul.f32 %v1877, %v1877
        %v1880 = vrot.slane %v1878, 7
        %v1882 = vsub.f32 %v1877, %v1880
        %v1883 = vmax.f32 %v1882, 0.0
        %v1884 = vadd.f32 %v1883, 0.001
        %v1885 = vrsqrt.pop %v1884
        %v1887 = vrot.slane %v1885, 1
        %v1889 = vmul.f32 %v1876, %v1887
        %v1890 = vmul.f32 %v1877, %v1889
        %v1892 = vrot.slane %v1890, 7
        %v1894 = vsub.f32 %v1876, %v1892
        loop: start=0, step=1, limit=4
        $region41: #{tpu_custom_call.1} parent=39 // loop_pre_header
          _
        $region42: #{tpu_custom_call.1} parent=39 // loop_header
          %s1896 = sphi 0, %s1900
          %p1897 = scmp.ge.s32.totalorder %s1896, 4
        $region43: #{tpu_custom_call.1} parent=39 // loop_header_branch
          %1899 = sbr.rel (%p1897) target = $region47
        $region44: #{tpu_custom_call.1} parent=39 // loop_body
          %s1901 = smul.u32 %s1896, 128
          %s1902 = scalar_lea.vmem [#allocation2], %s1901
          %v1903 = vld [vmem:[%s1902] sm:$0xff]
          %v1904 = vld [vmem:[%s1902 + $0x8] sm:$0xff]
          %v1905 = vld [vmem:[%s1902 + $0x10] sm:$0xff]
          %v1906 = vld [vmem:[%s1902 + $0x18] sm:$0xff]
          %v1907 = vld [vmem:[%s1902 + $0x20] sm:$0xff]
          %v1908 = vld [vmem:[%s1902 + $0x28] sm:$0xff]
          %v1909 = vld [vmem:[%s1902 + $0x30] sm:$0xff]
          %v1910 = vld [vmem:[%s1902 + $0x38] sm:$0xff]
          %v1911 = vld [vmem:[%s1902 + $0x40] sm:$0xff]
          %v1912 = vld [vmem:[%s1902 + $0x48] sm:$0xff]
          %v1913 = vld [vmem:[%s1902 + $0x50] sm:$0xff]
          %v1914 = vld [vmem:[%s1902 + $0x58] sm:$0xff]
          %v1915 = vld [vmem:[%s1902 + $0x60] sm:$0xff]
          %v1916 = vld [vmem:[%s1902 + $0x68] sm:$0xff]
          %v1917 = vld [vmem:[%s1902 + $0x70] sm:$0xff]
          %v1918 = vld [vmem:[%s1902 + $0x78] sm:$0xff]
          %v1919 = vlaneseq
          %v1920 = vshrl.u32 %v1919, 7
          %v1921 = vsub.s32 0, %v1920
          %v1922 = vrot.slane %v1889, %v1921
          %v1923 = vmul.f32 %v1903, %v1922
          %v1924 = vmul.f32 %v1904, %v1922
          %v1925 = vmul.f32 %v1905, %v1922
          %v1926 = vmul.f32 %v1906, %v1922
          %v1927 = vmul.f32 %v1907, %v1922
          %v1928 = vmul.f32 %v1908, %v1922
          %v1929 = vmul.f32 %v1909, %v1922
          %v1930 = vmul.f32 %v1910, %v1922
          %v1931 = vmul.f32 %v1911, %v1922
          %v1932 = vmul.f32 %v1912, %v1922
          %v1933 = vmul.f32 %v1913, %v1922
          %v1934 = vmul.f32 %v1914, %v1922
          %v1935 = vmul.f32 %v1915, %v1922
          %v1936 = vmul.f32 %v1916, %v1922
          %v1937 = vmul.f32 %v1917, %v1922
          %v1938 = vmul.f32 %v1918, %v1922
          %v1939 = vlaneseq
          %v1940 = vshrl.u32 %v1939, 7
          %v1941 = vsub.s32 1, %v1940
          %v1942 = vrot.slane %v1894, %v1941
          %v1943 = vadd.f32 %v1923, %v1942
          %v1944 = vadd.f32 %v1924, %v1942
          %v1945 = vadd.f32 %v1925, %v1942
          %v1946 = vadd.f32 %v1926, %v1942
          %v1947 = vadd.f32 %v1927, %v1942
          %v1948 = vadd.f32 %v1928, %v1942
          %v1949 = vadd.f32 %v1929, %v1942
          %v1950 = vadd.f32 %v1930, %v1942
          %v1951 = vadd.f32 %v1931, %v1942
          %v1952 = vadd.f32 %v1932, %v1942
          %v1953 = vadd.f32 %v1933, %v1942
          %v1954 = vadd.f32 %v1934, %v1942
          %v1955 = vadd.f32 %v1935, %v1942
          %v1956 = vadd.f32 %v1936, %v1942
          %v1957 = vadd.f32 %v1937, %v1942
          %v1958 = vadd.f32 %v1938, %v1942
          %v1959 = vxor.u32 %v1943, 2147483648
          %v1960 = vxor.u32 %v1944, 2147483648
          %v1961 = vxor.u32 %v1945, 2147483648
          %v1962 = vxor.u32 %v1946, 2147483648
          %v1963 = vxor.u32 %v1947, 2147483648
          %v1964 = vxor.u32 %v1948, 2147483648
          %v1965 = vxor.u32 %v1949, 2147483648
          %v1966 = vxor.u32 %v1950, 2147483648
          %v1967 = vxor.u32 %v1951, 2147483648
          %v1968 = vxor.u32 %v1952, 2147483648
          %v1969 = vxor.u32 %v1953, 2147483648
          %v1970 = vxor.u32 %v1954, 2147483648
          %v1971 = vxor.u32 %v1955, 2147483648
          %v1972 = vxor.u32 %v1956, 2147483648
          %v1973 = vxor.u32 %v1957, 2147483648
          %v1974 = vxor.u32 %v1958, 2147483648
          %v1975 = vmul.f32 %v1959, 1.442695
          %v1976 = vpow.pop %v1975
          %v1977 = vmul.f32 %v1960, 1.442695
          %v1978 = vpow.pop %v1977
          %v1979 = vmul.f32 %v1961, 1.442695
          %v1980 = vpow.pop %v1979
          %v1981 = vmul.f32 %v1962, 1.442695
          %v1982 = vpow.pop %v1981
          %v1983 = vmul.f32 %v1963, 1.442695
          %v1984 = vpow.pop %v1983
          %v1985 = vmul.f32 %v1964, 1.442695
          %v1986 = vpow.pop %v1985
          %v1987 = vmul.f32 %v1965, 1.442695
          %v1988 = vpow.pop %v1987
          %v1989 = vmul.f32 %v1966, 1.442695
          %v1990 = vpow.pop %v1989
          %v1991 = vmul.f32 %v1967, 1.442695
          %v1992 = vpow.pop %v1991
          %v1993 = vmul.f32 %v1968, 1.442695
          %v1994 = vpow.pop %v1993
          %v1995 = vmul.f32 %v1969, 1.442695
          %v1996 = vpow.pop %v1995
          %v1997 = vmul.f32 %v1970, 1.442695
          %v1998 = vpow.pop %v1997
          %v1999 = vmul.f32 %v1971, 1.442695
          %v2000 = vpow.pop %v1999
          %v2001 = vmul.f32 %v1972, 1.442695
          %v2002 = vpow.pop %v2001
          %v2003 = vmul.f32 %v1973, 1.442695
          %v2004 = vpow.pop %v2003
          %v2005 = vmul.f32 %v1974, 1.442695
          %v2006 = vpow.pop %v2005
          %v2007 = vadd.f32 %v1976, 1.0
          %v2008 = vadd.f32 %v1978, 1.0
          %v2009 = vadd.f32 %v1980, 1.0
          %v2010 = vadd.f32 %v1982, 1.0
          %v2011 = vadd.f32 %v1984, 1.0
          %v2012 = vadd.f32 %v1986, 1.0
          %v2013 = vadd.f32 %v1988, 1.0
          %v2014 = vadd.f32 %v1990, 1.0
          %v2015 = vadd.f32 %v1992, 1.0
          %v2016 = vadd.f32 %v1994, 1.0
          %v2017 = vadd.f32 %v1996, 1.0
          %v2018 = vadd.f32 %v1998, 1.0
          %v2019 = vadd.f32 %v2000, 1.0
          %v2020 = vadd.f32 %v2002, 1.0
          %v2021 = vadd.f32 %v2004, 1.0
          %v2022 = vadd.f32 %v2006, 1.0
          %v2023 = vrcp.pop %v2007
          %v2024 = vmul.f32 1.0, %v2023
          %v2025 = vrcp.pop %v2008
          %v2026 = vmul.f32 1.0, %v2025
          %v2027 = vrcp.pop %v2009
          %v2028 = vmul.f32 1.0, %v2027
          %v2029 = vrcp.pop %v2010
          %v2030 = vmul.f32 1.0, %v2029
          %v2031 = vrcp.pop %v2011
          %v2032 = vmul.f32 1.0, %v2031
          %v2033 = vrcp.pop %v2012
          %v2034 = vmul.f32 1.0, %v2033
          %v2035 = vrcp.pop %v2013
          %v2036 = vmul.f32 1.0, %v2035
          %v2037 = vrcp.pop %v2014
          %v2038 = vmul.f32 1.0, %v2037
          %v2039 = vrcp.pop %v2015
          %v2040 = vmul.f32 1.0, %v2039
          %v2041 = vrcp.pop %v2016
          %v2042 = vmul.f32 1.0, %v2041
          %v2043 = vrcp.pop %v2017
          %v2044 = vmul.f32 1.0, %v2043
          %v2045 = vrcp.pop %v2018
          %v2046 = vmul.f32 1.0, %v2045
          %v2047 = vrcp.pop %v2019
          %v2048 = vmul.f32 1.0, %v2047
          %v2049 = vrcp.pop %v2020
          %v2050 = vmul.f32 1.0, %v2049
          %v2051 = vrcp.pop %v2021
          %v2052 = vmul.f32 1.0, %v2051
          %v2053 = vrcp.pop %v2022
          %v2054 = vmul.f32 1.0, %v2053
          %v2055 = vmul.f32 %v1943, %v2024
          %v2056 = vmul.f32 %v1944, %v2026
          %v2057 = vmul.f32 %v1945, %v2028
          %v2058 = vmul.f32 %v1946, %v2030
          %v2059 = vmul.f32 %v1947, %v2032
          %v2060 = vmul.f32 %v1948, %v2034
          %v2061 = vmul.f32 %v1949, %v2036
          %v2062 = vmul.f32 %v1950, %v2038
          %v2063 = vmul.f32 %v1951, %v2040
          %v2064 = vmul.f32 %v1952, %v2042
          %v2065 = vmul.f32 %v1953, %v2044
          %v2066 = vmul.f32 %v1954, %v2046
          %v2067 = vmul.f32 %v1955, %v2048
          %v2068 = vmul.f32 %v1956, %v2050
          %v2069 = vmul.f32 %v1957, %v2052
          %v2070 = vmul.f32 %v1958, %v2054
          %s2071 = scalar_lea.vmem %s3, %s1901
          %vm2072 = vcmask 64512
          %2073 = vst.msk [vmem:[%s2071] sm:$0xff] %vm2072, %v2055
          %2074 = vst.msk [vmem:[%s2071 + $0x8] sm:$0xff] %vm2072, %v2056
          %2075 = vst.msk [vmem:[%s2071 + $0x10] sm:$0xff] %vm2072, %v2057
          %2076 = vst.msk [vmem:[%s2071 + $0x18] sm:$0xff] %vm2072, %v2058
          %2077 = vst.msk [vmem:[%s2071 + $0x20] sm:$0xff] %vm2072, %v2059
          %2078 = vst.msk [vmem:[%s2071 + $0x28] sm:$0xff] %vm2072, %v2060
          %2079 = vst.msk [vmem:[%s2071 + $0x30] sm:$0xff] %vm2072, %v2061
          %2080 = vst.msk [vmem:[%s2071 + $0x38] sm:$0xff] %vm2072, %v2062
          %2081 = vst.msk [vmem:[%s2071 + $0x40] sm:$0xff] %vm2072, %v2063
          %2082 = vst.msk [vmem:[%s2071 + $0x48] sm:$0xff] %vm2072, %v2064
          %2083 = vst.msk [vmem:[%s2071 + $0x50] sm:$0xff] %vm2072, %v2065
          %2084 = vst.msk [vmem:[%s2071 + $0x58] sm:$0xff] %vm2072, %v2066
          %2085 = vst.msk [vmem:[%s2071 + $0x60] sm:$0xff] %vm2072, %v2067
          %2086 = vst.msk [vmem:[%s2071 + $0x68] sm:$0xff] %vm2072, %v2068
          %2087 = vst.msk [vmem:[%s2071 + $0x70] sm:$0xff] %vm2072, %v2069
          %2088 = vst.msk [vmem:[%s2071 + $0x78] sm:$0xff] %vm2072, %v2070
        $region45: #{tpu_custom_call.1} parent=39 // loop_footer
          %s1900 = sadd.s32 1, %s1896
        $region46: #{tpu_custom_call.1} parent=39 // loop_footer_branch
          %1895 = sbr.rel target = $region42
        $region47: #{tpu_custom_call.1} parent=39 // loop_exit
          _
      $region40: #{tpu_custom_call.1} parent=31 // pred_fallthru
        _
      // Predicated region
      $region48: #{tpu_custom_call.1} parent=31 // pred_check
        %p2089 = pneg %p107
      $region49: #{tpu_custom_call.1} parent=31 // pred_check_branch
        %2091 = sbr.rel (%p2089) target = $region51
      $region50: #{tpu_custom_call.1} parent=31 // pred_region
        _
      $region51: #{tpu_custom_call.1} parent=31 // pred_fallthru
        _
      // Predicated region
      $region52: #{tpu_custom_call.1} parent=31 // pred_check
        %p2092 = pneg %p107
      $region53: #{tpu_custom_call.1} parent=31 // pred_check_branch
        %2094 = sbr.rel (%p2092) target = $region55
      $region54: #{tpu_custom_call.1} parent=31 // pred_region
        _
      $region55: #{tpu_custom_call.1} parent=31 // pred_fallthru
        _
    $region32: #{tpu_custom_call.1} parent=5 // pred_fallthru
      _
    %p2095 = scmp.le.s32.totalorder 2, %s9
    // Predicated region
    $region56: #{tpu_custom_call.1} parent=5 // pred_check
      %p2096 = pneg %p2095
    $region57: #{tpu_custom_call.1} parent=5 // pred_check_branch
      %2098 = sbr.rel (%p2096) target = $region59
    $region58: #{tpu_custom_call.1} parent=5 // pred_region
      %s2099 = ssub.s32 %s9, 2
    $region59: #{tpu_custom_call.1} parent=5 // pred_fallthru
      _
  $region6: #{tpu_custom_call.1} parent=0 // loop_footer
    %s13 = sadd.s32 1, %s9
  $region7: #{tpu_custom_call.1} parent=0 // loop_footer_branch
    %8 = sbr.rel target = $region3
  $region8: #{tpu_custom_call.1} parent=0 // loop_exit
    _

</llo_original>
